<compile_context>
chip_gen: v7x
topology: tpu7x:2x2x1
jax: 0.10.0
libtpu: 0.0.40
codegen_flags: <defaults>
</compile_context>

<pallas_src>
import functools

import jax
import jax.numpy as jnp
from jax.experimental import pallas as pl
from jax.experimental.pallas import tpu as pltpu


def _default_vmem_budget():
    """Per-core VMEM budget (bytes): headroom on v7x (64 MiB/TC), most of the
    128 MiB on v5e/v6e; conservative 48 MiB if the query is unavailable."""
    cap = 64 << 20
    try:
        cap = int(getattr(pltpu.get_tpu_info(), "vmem_capacity_bytes", cap))
    except Exception:
        pass
    return int(min(max(cap - (16 << 20), 32 << 20), 112 << 20))


def _pick_tile_h(H, W, C_in, C_out, in_bytes, out_bytes, budget):
    """Largest divisor of H whose per-step working set fits ~half the budget
    (the rest covers weights, compiler scratch and temporaries)."""
    for th in range(H, 0, -1):
        if H % th:
            continue
        need = (2 * (th + 2) * (W + 2) * C_in * in_bytes   # dbl-buffered input window
                + 2 * th * W * C_out * out_bytes           # dbl-buffered output tile
                + 2 * th * W * C_in * 4                    # dw accumulator + shifted slice (f32)
                + th * W * C_out * 4)                      # matmul result (f32)
        if need <= budget // 2:
            return th
    return 1


def _dwsep_kernel(x_ref, taps_ref, wpw_ref, shift_ref, o_ref, *,
                  TH, W, C_in, C_out, K, mxu_dtype):
    """One grid step = one (TH, W) spatial tile of one image.

    x_ref     : (TH+K-1, W+K-1, C_in)  spatially pre-padded input window
    taps_ref  : (K*K, 1, C_in)         depthwise taps (f32)
    wpw_ref   : (C_in, C_out)          pointwise weight * BN scale
    shift_ref : (1, C_out)             folded BN shift (f32)
    o_ref     : (TH, W, C_out)         output tile
    """
    xp = x_ref[...].astype(jnp.float32)

    # ---- depthwise 3x3: 9 VPU broadcast-FMAs, f32 accumulation ----
    dw = jnp.zeros((TH, W, C_in), jnp.float32)
    for kh in range(K):
        for kw in range(K):
            tap = taps_ref[kh * K + kw]                     # (1, C_in)
            dw = dw + xp[kh:kh + TH, kw:kw + W, :] * tap

    # ---- pointwise 1x1 (BN scale folded into weight): ONE MXU matmul ----
    y = jnp.dot(dw.reshape(TH * W, C_in).astype(mxu_dtype), wpw_ref[...],
                preferred_element_type=jnp.float32)

    # ---- BN shift + ReLU6 epilogue ----
    y = jnp.clip(y + shift_ref[...], 0.0, 6.0)
    o_ref[...] = y.reshape(TH, W, C_out).astype(o_ref.dtype)


def depthwise_separable_conv_nhwc(x_nhwc, w_dw, w_pw, gamma, beta, run_mean,
                                  run_var, eps=1e-5, *,
                                  compute_dtype=jnp.float32, tile_h=None,
                                  vmem_budget_bytes=None):
    """NHWC end-to-end (no layout transposes). x_nhwc: (B, H, W, C_in)."""
    B, H, W, C_in = x_nhwc.shape
    C_out = w_pw.shape[0]
    K = w_dw.shape[-1]
    pad = K // 2

    cdt = jnp.dtype(compute_dtype)
    out_dtype = x_nhwc.dtype

    if vmem_budget_bytes is None:
        vmem_budget_bytes = _default_vmem_budget()
    if tile_h is None:
        tile_h = _pick_tile_h(H, W, C_in, C_out, cdt.itemsize,
                              jnp.dtype(out_dtype).itemsize, vmem_budget_bytes)
    assert H % tile_h == 0, "tile_h must divide H"
    TH = tile_h
    nH = H // TH
    n_tiles = B * nH

    # ---- fold eval-mode BN into the pointwise weight + a shift vector ----
    scale = gamma / jnp.sqrt(run_var + eps)                               # (C_out,)
    shift = (beta - run_mean * scale).reshape(1, C_out).astype(jnp.float32)
    taps = jnp.transpose(w_dw[:, 0, :, :], (1, 2, 0)).reshape(K * K, 1, C_in)
    taps = taps.astype(jnp.float32)                                       # (K*K,1,C_in)
    wpw = (jnp.transpose(w_pw[:, :, 0, 0], (1, 0)) * scale[None, :]).astype(cdt)

    # ---- one contiguous spatial pad + per-tile halo windows (HBM side) ----
    xpad = jnp.pad(x_nhwc.astype(cdt), ((0, 0), (pad, pad), (pad, pad), (0, 0)))
    win = jnp.stack(
        [jax.lax.slice_in_dim(xpad, s, s + TH + 2 * pad, axis=1)
         for s in range(0, H, TH)], axis=1)           # (B, nH, TH+2p, W+2p, C_in)
    x_tiles = win.reshape(n_tiles * (TH + 2 * pad), W + 2 * pad, C_in)

    kernel = functools.partial(_dwsep_kernel, TH=TH, W=W, C_in=C_in,
                               C_out=C_out, K=K, mxu_dtype=cdt)

    cost = pl.CostEstimate(
        flops=2 * B * H * W * C_in * (K * K + C_out),
        transcendentals=0,
        bytes_accessed=int(x_tiles.size * cdt.itemsize
                           + B * H * W * C_out * jnp.dtype(out_dtype).itemsize
                           + taps.size * 4 + wpw.size * cdt.itemsize
                           + shift.size * 4))

    out_flat = pl.pallas_call(
        kernel,
        out_shape=jax.ShapeDtypeStruct((B * H, W, C_out), out_dtype),
        grid=(n_tiles,),
        in_specs=[
            pl.BlockSpec((TH + 2 * pad, W + 2 * pad, C_in), lambda i: (i, 0, 0)),
            pl.BlockSpec((K * K, 1, C_in), lambda i: (0, 0, 0)),
            pl.BlockSpec((C_in, C_out), lambda i: (0, 0)),
            pl.BlockSpec((1, C_out), lambda i: (0, 0)),
        ],
        out_specs=pl.BlockSpec((TH, W, C_out), lambda i: (i, 0, 0)),
        compiler_params=pltpu.CompilerParams(
            dimension_semantics=("parallel",),
            vmem_limit_bytes=int(vmem_budget_bytes)),
        cost_estimate=cost,
    )(x_tiles, taps, wpw, shift)

    # Pure metadata reshape; no padding to strip, no extra HBM pass.
    return out_flat.reshape(B, H, W, C_out)


def depthwise_separable_conv(x_nchw, w_dw, w_pw, gamma, beta, run_mean, run_var,
                             eps=1e-5, *, compute_dtype=jnp.float32,
                             tile_h=None, vmem_budget_bytes=None):
    """PyTorch-parity wrapper: (B, C_in, H, W) -> (B, C_out, H, W).
    For production, stay NHWC and call depthwise_separable_conv_nhwc directly
    (these transposes are full HBM passes kept only for parity testing)."""
    x_nhwc = jnp.transpose(x_nchw, (0, 2, 3, 1))
    out = depthwise_separable_conv_nhwc(
        x_nhwc, w_dw, w_pw, gamma, beta, run_mean, run_var, eps,
        compute_dtype=compute_dtype, tile_h=tile_h,
        vmem_budget_bytes=vmem_budget_bytes)
    return jnp.transpose(out, (0, 3, 1, 2)).astype(x_nchw.dtype)


def _reference(x, w_dw, w_pw, gamma, beta, run_mean, run_var, eps=1e-5):
    """Pure-JAX reference (NCHW, mirrors the PyTorch ops)."""
    C_in = x.shape[1]
    dw = jax.lax.conv_general_dilated(
        x, w_dw, window_strides=(1, 1), padding=((1, 1), (1, 1)),
        dimension_numbers=("NCHW", "OIHW", "NCHW"), feature_group_count=C_in)
    pw = jax.lax.conv_general_dilated(
        dw, w_pw, window_strides=(1, 1), padding=((0, 0), (0, 0)),
        dimension_numbers=("NCHW", "OIHW", "NCHW"))
    s = (gamma / jnp.sqrt(run_var + eps))[None, :, None, None]
    b = (beta - run_mean * gamma / jnp.sqrt(run_var + eps))[None, :, None, None]
    return jnp.clip(pw * s + b, 0.0, 6.0)


if __name__ == "__main__":
    B, C_in, C_out, H, W = 2, 4, 8, 16, 16

    key = jax.random.PRNGKey(0)
    kx, kdw, kpw = jax.random.split(key, 3)

    x = jax.random.normal(kx, (B, C_in, H, W), dtype=jnp.float32)
    # PyTorch parameter shapes: depthwise (C_in, 1, 3, 3), pointwise (C_out, C_in, 1, 1)
    w_dw = jax.random.normal(kdw, (C_in, 1, 3, 3), dtype=jnp.float32) * 0.2
    w_pw = jax.random.normal(kpw, (C_out, C_in, 1, 1), dtype=jnp.float32) * 0.2
    # Deterministic BatchNorm params / running stats (eval-mode semantics).
    gamma = jnp.linspace(0.8, 1.2, C_out, dtype=jnp.float32)
    beta = jnp.linspace(-0.1, 0.1, C_out, dtype=jnp.float32)
    run_mean = jnp.linspace(-0.05, 0.05, C_out, dtype=jnp.float32)
    run_var = jnp.linspace(0.9, 1.1, C_out, dtype=jnp.float32)

    ref = _reference(x, w_dw, w_pw, gamma, beta, run_mean, run_var)

    # Default path: whole image per grid step, f32 operands.
    out = depthwise_separable_conv(x, w_dw, w_pw, gamma, beta, run_mean, run_var)
    out = jax.block_until_ready(out)
    assert out.shape == (B, C_out, H, W)
    assert jnp.allclose(out, ref, atol=1e-3, rtol=1e-3)

    # H-tiled path (exercises the halo-window construction).
    out_t = depthwise_separable_conv(x, w_dw, w_pw, gamma, beta, run_mean,
                                     run_var, tile_h=8)
    out_t = jax.block_until_ready(out_t)
    assert jnp.allclose(out_t, ref, atol=1e-3, rtol=1e-3)

    # bf16 MXU operands with f32 accumulation (v6e/v7x path), looser check.
    out_bf16 = depthwise_separable_conv(x, w_dw, w_pw, gamma, beta, run_mean,
                                        run_var, compute_dtype=jnp.bfloat16)
    out_bf16 = jax.block_until_ready(out_bf16)
    assert jnp.allclose(out_bf16, ref, atol=5e-2, rtol=5e-2)

    print("KERNEL_OK")
</pallas_src>

<mosaic_0001>
module attributes {stable_mosaic.version = 11 : i64} {
  func.func @_dwsep_kernel(%arg0: i32, %arg1: memref<18x18x4xf32, #tpu.memory_space<vmem>>, %arg2: memref<9x1x4xf32, #tpu.memory_space<vmem>>, %arg3: memref<4x8xf32, #tpu.memory_space<vmem>>, %arg4: memref<1x8xf32, #tpu.memory_space<vmem>>, %arg5: memref<16x16x8xf32, #tpu.memory_space<vmem>>) attributes {dimension_semantics = [#tpu.dimension_semantics<parallel>], iteration_bounds = array<i64: 2>, scalar_prefetch = 0 : i64, scratch_operands = 0 : i64, tpu.core_type = #tpu.core_type<tc>, window_params = [{transform_indices = @transform_0, window_bounds = array<i64: 18, 18, 4>}, {pipeline_mode = #tpu.pipeline_mode<synchronous>, transform_indices = @transform_1, window_bounds = array<i64: 9, 1, 4>}, {pipeline_mode = #tpu.pipeline_mode<synchronous>, transform_indices = @transform_2, window_bounds = array<i64: 4, 8>}, {pipeline_mode = #tpu.pipeline_mode<synchronous>, transform_indices = @transform_3, window_bounds = array<i64: 1, 8>}, {transform_indices = @transform_4, window_bounds = array<i64: 16, 16, 8>}]} {
    %c0 = arith.constant 0 : index
    %c0_0 = arith.constant 0 : index
    %c0_1 = arith.constant 0 : index
    %0 = vector.load %arg1[%c0, %c0_0, %c0_1] : memref<18x18x4xf32, #tpu.memory_space<vmem>>, vector<18x18x4xf32>
    %cst = arith.constant 0.000000e+00 : f32
    %1 = vector.broadcast %cst : f32 to vector<16x16x4xf32>
    %c0_2 = arith.constant 0 : index
    %c0_3 = arith.constant 0 : index
    %c0_4 = arith.constant 0 : index
    %2 = vector.load %arg2[%c0_2, %c0_3, %c0_4] : memref<9x1x4xf32, #tpu.memory_space<vmem>>, vector<1x1x4xf32>
    %3 = vector.shape_cast %2 : vector<1x1x4xf32> to vector<1x4xf32>
    %4 = vector.extract_strided_slice %0 {offsets = [0, 0, 0], sizes = [16, 16, 4], strides = [1, 1, 1]} : vector<18x18x4xf32> to vector<16x16x4xf32>
    %5 = vector.shape_cast %3 : vector<1x4xf32> to vector<1x1x4xf32>
    %6 = vector.broadcast %5 : vector<1x1x4xf32> to vector<16x16x4xf32>
    %7 = arith.mulf %4, %6 : vector<16x16x4xf32>
    %8 = arith.addf %1, %7 : vector<16x16x4xf32>
    %c1 = arith.constant 1 : index
    %c0_5 = arith.constant 0 : index
    %c0_6 = arith.constant 0 : index
    %9 = vector.load %arg2[%c1, %c0_5, %c0_6] : memref<9x1x4xf32, #tpu.memory_space<vmem>>, vector<1x1x4xf32>
    %10 = vector.shape_cast %9 : vector<1x1x4xf32> to vector<1x4xf32>
    %11 = vector.extract_strided_slice %0 {offsets = [0, 1, 0], sizes = [16, 16, 4], strides = [1, 1, 1]} : vector<18x18x4xf32> to vector<16x16x4xf32>
    %12 = vector.shape_cast %10 : vector<1x4xf32> to vector<1x1x4xf32>
    %13 = vector.broadcast %12 : vector<1x1x4xf32> to vector<16x16x4xf32>
    %14 = arith.mulf %11, %13 : vector<16x16x4xf32>
    %15 = arith.addf %8, %14 : vector<16x16x4xf32>
    %c2 = arith.constant 2 : index
    %c0_7 = arith.constant 0 : index
    %c0_8 = arith.constant 0 : index
    %16 = vector.load %arg2[%c2, %c0_7, %c0_8] : memref<9x1x4xf32, #tpu.memory_space<vmem>>, vector<1x1x4xf32>
    %17 = vector.shape_cast %16 : vector<1x1x4xf32> to vector<1x4xf32>
    %18 = vector.extract_strided_slice %0 {offsets = [0, 2, 0], sizes = [16, 16, 4], strides = [1, 1, 1]} : vector<18x18x4xf32> to vector<16x16x4xf32>
    %19 = vector.shape_cast %17 : vector<1x4xf32> to vector<1x1x4xf32>
    %20 = vector.broadcast %19 : vector<1x1x4xf32> to vector<16x16x4xf32>
    %21 = arith.mulf %18, %20 : vector<16x16x4xf32>
    %22 = arith.addf %15, %21 : vector<16x16x4xf32>
    %c3 = arith.constant 3 : index
    %c0_9 = arith.constant 0 : index
    %c0_10 = arith.constant 0 : index
    %23 = vector.load %arg2[%c3, %c0_9, %c0_10] : memref<9x1x4xf32, #tpu.memory_space<vmem>>, vector<1x1x4xf32>
    %24 = vector.shape_cast %23 : vector<1x1x4xf32> to vector<1x4xf32>
    %25 = vector.extract_strided_slice %0 {offsets = [1, 0, 0], sizes = [16, 16, 4], strides = [1, 1, 1]} : vector<18x18x4xf32> to vector<16x16x4xf32>
    %26 = vector.shape_cast %24 : vector<1x4xf32> to vector<1x1x4xf32>
    %27 = vector.broadcast %26 : vector<1x1x4xf32> to vector<16x16x4xf32>
    %28 = arith.mulf %25, %27 : vector<16x16x4xf32>
    %29 = arith.addf %22, %28 : vector<16x16x4xf32>
    %c4 = arith.constant 4 : index
    %c0_11 = arith.constant 0 : index
    %c0_12 = arith.constant 0 : index
    %30 = vector.load %arg2[%c4, %c0_11, %c0_12] : memref<9x1x4xf32, #tpu.memory_space<vmem>>, vector<1x1x4xf32>
    %31 = vector.shape_cast %30 : vector<1x1x4xf32> to vector<1x4xf32>
    %32 = vector.extract_strided_slice %0 {offsets = [1, 1, 0], sizes = [16, 16, 4], strides = [1, 1, 1]} : vector<18x18x4xf32> to vector<16x16x4xf32>
    %33 = vector.shape_cast %31 : vector<1x4xf32> to vector<1x1x4xf32>
    %34 = vector.broadcast %33 : vector<1x1x4xf32> to vector<16x16x4xf32>
    %35 = arith.mulf %32, %34 : vector<16x16x4xf32>
    %36 = arith.addf %29, %35 : vector<16x16x4xf32>
    %c5 = arith.constant 5 : index
    %c0_13 = arith.constant 0 : index
    %c0_14 = arith.constant 0 : index
    %37 = vector.load %arg2[%c5, %c0_13, %c0_14] : memref<9x1x4xf32, #tpu.memory_space<vmem>>, vector<1x1x4xf32>
    %38 = vector.shape_cast %37 : vector<1x1x4xf32> to vector<1x4xf32>
    %39 = vector.extract_strided_slice %0 {offsets = [1, 2, 0], sizes = [16, 16, 4], strides = [1, 1, 1]} : vector<18x18x4xf32> to vector<16x16x4xf32>
    %40 = vector.shape_cast %38 : vector<1x4xf32> to vector<1x1x4xf32>
    %41 = vector.broadcast %40 : vector<1x1x4xf32> to vector<16x16x4xf32>
    %42 = arith.mulf %39, %41 : vector<16x16x4xf32>
    %43 = arith.addf %36, %42 : vector<16x16x4xf32>
    %c6 = arith.constant 6 : index
    %c0_15 = arith.constant 0 : index
    %c0_16 = arith.constant 0 : index
    %44 = vector.load %arg2[%c6, %c0_15, %c0_16] : memref<9x1x4xf32, #tpu.memory_space<vmem>>, vector<1x1x4xf32>
    %45 = vector.shape_cast %44 : vector<1x1x4xf32> to vector<1x4xf32>
    %46 = vector.extract_strided_slice %0 {offsets = [2, 0, 0], sizes = [16, 16, 4], strides = [1, 1, 1]} : vector<18x18x4xf32> to vector<16x16x4xf32>
    %47 = vector.shape_cast %45 : vector<1x4xf32> to vector<1x1x4xf32>
    %48 = vector.broadcast %47 : vector<1x1x4xf32> to vector<16x16x4xf32>
    %49 = arith.mulf %46, %48 : vector<16x16x4xf32>
    %50 = arith.addf %43, %49 : vector<16x16x4xf32>
    %c7 = arith.constant 7 : index
    %c0_17 = arith.constant 0 : index
    %c0_18 = arith.constant 0 : index
    %51 = vector.load %arg2[%c7, %c0_17, %c0_18] : memref<9x1x4xf32, #tpu.memory_space<vmem>>, vector<1x1x4xf32>
    %52 = vector.shape_cast %51 : vector<1x1x4xf32> to vector<1x4xf32>
    %53 = vector.extract_strided_slice %0 {offsets = [2, 1, 0], sizes = [16, 16, 4], strides = [1, 1, 1]} : vector<18x18x4xf32> to vector<16x16x4xf32>
    %54 = vector.shape_cast %52 : vector<1x4xf32> to vector<1x1x4xf32>
    %55 = vector.broadcast %54 : vector<1x1x4xf32> to vector<16x16x4xf32>
    %56 = arith.mulf %53, %55 : vector<16x16x4xf32>
    %57 = arith.addf %50, %56 : vector<16x16x4xf32>
    %c8 = arith.constant 8 : index
    %c0_19 = arith.constant 0 : index
    %c0_20 = arith.constant 0 : index
    %58 = vector.load %arg2[%c8, %c0_19, %c0_20] : memref<9x1x4xf32, #tpu.memory_space<vmem>>, vector<1x1x4xf32>
    %59 = vector.shape_cast %58 : vector<1x1x4xf32> to vector<1x4xf32>
    %60 = vector.extract_strided_slice %0 {offsets = [2, 2, 0], sizes = [16, 16, 4], strides = [1, 1, 1]} : vector<18x18x4xf32> to vector<16x16x4xf32>
    %61 = vector.shape_cast %59 : vector<1x4xf32> to vector<1x1x4xf32>
    %62 = vector.broadcast %61 : vector<1x1x4xf32> to vector<16x16x4xf32>
    %63 = arith.mulf %60, %62 : vector<16x16x4xf32>
    %64 = arith.addf %57, %63 : vector<16x16x4xf32>
    %65 = vector.shape_cast %64 : vector<16x16x4xf32> to vector<256x4xf32>
    %c0_21 = arith.constant 0 : index
    %c0_22 = arith.constant 0 : index
    %66 = vector.load %arg3[%c0_21, %c0_22] : memref<4x8xf32, #tpu.memory_space<vmem>>, vector<4x8xf32>
    %cst_23 = arith.constant dense<0.000000e+00> : vector<256x8xf32>
    %67 = tpu.matmul %65, %66, %cst_23 {dimension_numbers = #tpu.dot_dimension_numbers<[1], [0], [0], [1], [0, 0, 1, 1], [], []>} : vector<256x4xf32>, vector<4x8xf32>, vector<256x8xf32> -> vector<256x8xf32>
    %c0_24 = arith.constant 0 : index
    %c0_25 = arith.constant 0 : index
    %68 = vector.load %arg4[%c0_24, %c0_25] : memref<1x8xf32, #tpu.memory_space<vmem>>, vector<1x8xf32>
    %69 = vector.broadcast %68 : vector<1x8xf32> to vector<256x8xf32>
    %70 = arith.addf %67, %69 : vector<256x8xf32>
    %cst_26 = arith.constant 0.000000e+00 : f32
    %cst_27 = arith.constant 6.000000e+00 : f32
    %71 = vector.broadcast %cst_26 : f32 to vector<256x8xf32>
    %72 = arith.maximumf %71, %70 : vector<256x8xf32>
    %73 = vector.broadcast %cst_27 : f32 to vector<256x8xf32>
    %74 = arith.minimumf %73, %72 : vector<256x8xf32>
    %75 = vector.shape_cast %74 : vector<256x8xf32> to vector<16x16x8xf32>
    %c0_28 = arith.constant 0 : index
    %c0_29 = arith.constant 0 : index
    %c0_30 = arith.constant 0 : index
    %76 = vector.load %arg5[%c0_28, %c0_29, %c0_30] : memref<16x16x8xf32, #tpu.memory_space<vmem>>, vector<16x16x8xf32>
    tpu.vector_store %arg5[%c0_28, %c0_29, %c0_30], %75 {strides = array<i32>} : memref<16x16x8xf32, #tpu.memory_space<vmem>>, vector<16x16x8xf32>,
    return
  }
  func.func @transform_0(%arg0: i32) -> (i32, i32, i32) {
    %c0_i32 = arith.constant 0 : i32
    %c0_i32_0 = arith.constant 0 : i32
    %c0_i32_1 = arith.constant 0 : i32
    return %arg0, %c0_i32, %c0_i32_0 : i32, i32, i32
  }
  func.func @transform_1(%arg0: i32) -> (i32, i32, i32) {
    %c0_i32 = arith.constant 0 : i32
    %c0_i32_0 = arith.constant 0 : i32
    %c0_i32_1 = arith.constant 0 : i32
    %c0_i32_2 = arith.constant 0 : i32
    return %c0_i32, %c0_i32_0, %c0_i32_1 : i32, i32, i32
  }
  func.func @transform_2(%arg0: i32) -> (i32, i32) {
    %c0_i32 = arith.constant 0 : i32
    %c0_i32_0 = arith.constant 0 : i32
    %c0_i32_1 = arith.constant 0 : i32
    return %c0_i32, %c0_i32_0 : i32, i32
  }
  func.func @transform_3(%arg0: i32) -> (i32, i32) {
    %c0_i32 = arith.constant 0 : i32
    %c0_i32_0 = arith.constant 0 : i32
    %c0_i32_1 = arith.constant 0 : i32
    return %c0_i32, %c0_i32_0 : i32, i32
  }
  func.func @transform_4(%arg0: i32) -> (i32, i32, i32) {
    %c0_i32 = arith.constant 0 : i32
    %c0_i32_0 = arith.constant 0 : i32
    %c0_i32_1 = arith.constant 0 : i32
    return %arg0, %c0_i32, %c0_i32_0 : i32, i32, i32
  }
}

</mosaic_0001>

<llo_original>
// kernel: tpu_custom_call.1
$region0: #{tpu_custom_call.1}
  #allocation0 [shape = 'u32[]', space=smem, size = 0x4, offset = 0x4, fixed_abs, tag = 'smem constant byte address 0x4 - core index']
  #allocation1 [shape = 'u32[144,128]{1,0:T(1,128)}', space=vmem, size = 0x12000, scoped, tag = 'internal scratch']
  %s0 = inlined_call_operand.vmem [shape: f32[36,18,4], index: 0, kind: input, shape index: {}]
  %s1 = inlined_call_operand.vmem [shape: f32[9,1,4], index: 1, kind: input, shape index: {}]
  %s2 = inlined_call_operand.vmem [shape: f32[4,8], index: 2, kind: input, shape index: {}]
  %s3 = inlined_call_operand.vmem [shape: f32[1,8], index: 3, kind: input, shape index: {}]
  %s4 = inlined_call_operand.vmem [shape: f32[32,16,8], index: 4, kind: output, shape index: {}]
  %s5 = sld [smem:[#allocation0]]
  $region49: #{tpu_custom_call.1} parent=0
    _
  %s7 = ssub.s32 1, %s5
  %s8 = scalar_select 0, %s7, %s5
  loop: start=0, step=1, limit=4
  $region2: #{tpu_custom_call.1} parent=0 // loop_pre_header
    _
  $region3: #{tpu_custom_call.1} parent=0 // loop_header
    %s10 = sphi 0, %s14
    %p11 = scmp.ge.s32.totalorder %s10, 4
    %s20 = sphi 0, %s22
    %s23 = sphi 0, %s20
    %s24 = sphi 0, %s23
    %s40 = sphi 0, %s24
    %s44 = sphi 0, %s44
    %s46 = sphi 0, %s44
    %s47 = sphi 0, %s46
    %s61 = sphi 0, %s47
    %s65 = sphi 0, %s65
    %s67 = sphi 0, %s65
    %s68 = sphi 0, %s67
    %s82 = sphi 0, %s68
    %s86 = sphi 0, %s86
    %s88 = sphi 0, %s86
    %s89 = sphi 0, %s88
    %s103 = sphi 0, %s89
    %s109 = sphi 0, %s111
    %s112 = sphi 0, %s109
    %s113 = sphi 0, %s112
    %s129 = sphi 0, %s113
  $region4: #{tpu_custom_call.1} parent=0 // loop_header_branch
    %13 = sbr.rel (%p11) target = $region8
  $region5: #{tpu_custom_call.1} parent=0 // loop_body
    %s15 = ssub.s32 %s10, 1
    %s16 = ssub.s32 %s10, 2
    %s17 = sadd.s32 %s10, 1
    %s18 = ssub.s32 %s10, %s17
    %p19 = scmp.eq.s32.totalorder %s18, 0
    %s21 = sadd.s32 %s20, 1
    %s22 = scalar_select %p19, %s20, %s21
    %p25 = pneg %p19
    %p26 = scmp.eq.s32.totalorder %s10, 1
    %p27 = por %p25, %p26
    %p28 = scmp.ne.s32.totalorder %s20, %s23
    %p29 = scmp.eq.s32.totalorder %s10, 0
    %p30 = por %p28, %p29
    %p31 = scmp.ne.s32.totalorder %s20, %s23
    %p32 = scmp.eq.s32.totalorder %s15, 1
    %p33 = por %p31, %p32
    %p34 = scmp.ne.s32.totalorder %s23, %s24
    %p35 = scmp.eq.s32.totalorder %s15, 0
    %p36 = por %p34, %p35
    %p37 = scmp.ne.s32.totalorder %s23, %s24
    %p38 = scmp.eq.s32.totalorder %s16, 1
    %p39 = por %p37, %p38
    %p41 = scmp.ne.s32.totalorder %s24, %s40
    %p42 = scmp.eq.s32.totalorder %s16, 0
    %p43 = por %p41, %p42
    %s45 = sadd.s32 %s44, 1
    %p48 = scmp.eq.s32.totalorder %s10, 1
    %p49 = scmp.ne.s32.totalorder %s44, %s46
    %p50 = scmp.eq.s32.totalorder %s10, 0
    %p51 = por %p49, %p50
    %p52 = scmp.ne.s32.totalorder %s44, %s46
    %p53 = scmp.eq.s32.totalorder %s15, 1
    %p54 = por %p52, %p53
    %p55 = scmp.ne.s32.totalorder %s46, %s47
    %p56 = scmp.eq.s32.totalorder %s15, 0
    %p57 = por %p55, %p56
    %p58 = scmp.ne.s32.totalorder %s46, %s47
    %p59 = scmp.eq.s32.totalorder %s16, 1
    %p60 = por %p58, %p59
    %p62 = scmp.ne.s32.totalorder %s47, %s61
    %p63 = scmp.eq.s32.totalorder %s16, 0
    %p64 = por %p62, %p63
    %s66 = sadd.s32 %s65, 1
    %p69 = scmp.eq.s32.totalorder %s10, 1
    %p70 = scmp.ne.s32.totalorder %s65, %s67
    %p71 = scmp.eq.s32.totalorder %s10, 0
    %p72 = por %p70, %p71
    %p73 = scmp.ne.s32.totalorder %s65, %s67
    %p74 = scmp.eq.s32.totalorder %s15, 1
    %p75 = por %p73, %p74
    %p76 = scmp.ne.s32.totalorder %s67, %s68
    %p77 = scmp.eq.s32.totalorder %s15, 0
    %p78 = por %p76, %p77
    %p79 = scmp.ne.s32.totalorder %s67, %s68
    %p80 = scmp.eq.s32.totalorder %s16, 1
    %p81 = por %p79, %p80
    %p83 = scmp.ne.s32.totalorder %s68, %s82
    %p84 = scmp.eq.s32.totalorder %s16, 0
    %p85 = por %p83, %p84
    %s87 = sadd.s32 %s86, 1
    %p90 = scmp.eq.s32.totalorder %s10, 1
    %p91 = scmp.ne.s32.totalorder %s86, %s88
    %p92 = scmp.eq.s32.totalorder %s10, 0
    %p93 = por %p91, %p92
    %p94 = scmp.ne.s32.totalorder %s86, %s88
    %p95 = scmp.eq.s32.totalorder %s15, 1
    %p96 = por %p94, %p95
    %p97 = scmp.ne.s32.totalorder %s88, %s89
    %p98 = scmp.eq.s32.totalorder %s15, 0
    %p99 = por %p97, %p98
    %p100 = scmp.ne.s32.totalorder %s88, %s89
    %p101 = scmp.eq.s32.totalorder %s16, 1
    %p102 = por %p100, %p101
    %p104 = scmp.ne.s32.totalorder %s89, %s103
    %p105 = scmp.eq.s32.totalorder %s16, 0
    %p106 = por %p104, %p105
    %s107 = ssub.s32 %s10, %s17
    %p108 = scmp.eq.s32.totalorder %s107, 0
    %s110 = sadd.s32 %s109, 1
    %s111 = scalar_select %p108, %s109, %s110
    %p114 = pneg %p108
    %p115 = scmp.eq.s32.totalorder %s10, 1
    %p116 = por %p114, %p115
    %p117 = scmp.ne.s32.totalorder %s109, %s112
    %p118 = scmp.eq.s32.totalorder %s10, 0
    %p119 = por %p117, %p118
    %p120 = scmp.ne.s32.totalorder %s109, %s112
    %p121 = scmp.eq.s32.totalorder %s15, 1
    %p122 = por %p120, %p121
    %p123 = scmp.ne.s32.totalorder %s112, %s113
    %p124 = scmp.eq.s32.totalorder %s15, 0
    %p125 = por %p123, %p124
    %p126 = scmp.ne.s32.totalorder %s112, %s113
    %p127 = scmp.eq.s32.totalorder %s16, 1
    %p128 = por %p126, %p127
    %p130 = scmp.ne.s32.totalorder %s113, %s129
    %p131 = scmp.eq.s32.totalorder %s16, 0
    %p132 = por %p130, %p131
    %p133 = scmp.le.s32.totalorder 1, %s10
    %p134 = scmp.lt.s32.totalorder %s10, 3
    %p135 = pnand %p133, %p134
    %p136 = pneg %p135
    // Predicated region
    $region9: #{tpu_custom_call.1} parent=5 // pred_check
      _
    $region10: #{tpu_custom_call.1} parent=5 // pred_check_branch
      %138 = sbr.rel (%p135) target = $region12
    $region11: #{tpu_custom_call.1} parent=5 // pred_region
      %s139 = ssub.s32 %s10, 1
      // Predicated region
      $region13: #{tpu_custom_call.1} parent=11 // pred_check
        %p140 = pneg %p57
      $region14: #{tpu_custom_call.1} parent=11 // pred_check_branch
        %142 = sbr.rel (%p140) target = $region16
      $region15: #{tpu_custom_call.1} parent=11 // pred_region
        _
      $region16: #{tpu_custom_call.1} parent=11 // pred_fallthru
        _
      // Predicated region
      $region17: #{tpu_custom_call.1} parent=11 // pred_check
        %p143 = pneg %p78
      $region18: #{tpu_custom_call.1} parent=11 // pred_check_branch
        %145 = sbr.rel (%p143) target = $region20
      $region19: #{tpu_custom_call.1} parent=11 // pred_region
        _
      $region20: #{tpu_custom_call.1} parent=11 // pred_fallthru
        _
      // Predicated region
      $region21: #{tpu_custom_call.1} parent=11 // pred_check
        %p146 = pneg %p99
      $region22: #{tpu_custom_call.1} parent=11 // pred_check_branch
        %148 = sbr.rel (%p146) target = $region24
      $region23: #{tpu_custom_call.1} parent=11 // pred_region
        _
      $region24: #{tpu_custom_call.1} parent=11 // pred_fallthru
        _
    $region12: #{tpu_custom_call.1} parent=5 // pred_fallthru
      _
    %p149 = scmp.lt.s32.totalorder %s10, 2
    // Predicated region
    $region25: #{tpu_custom_call.1} parent=5 // pred_check
      %p150 = pneg %p149
    $region26: #{tpu_custom_call.1} parent=5 // pred_check_branch
      %152 = sbr.rel (%p150) target = $region28
    $region27: #{tpu_custom_call.1} parent=5 // pred_region
      // Predicated region
      $region29: #{tpu_custom_call.1} parent=27 // pred_check
        %p153 = pneg %p30
      $region30: #{tpu_custom_call.1} parent=27 // pred_check_branch
        %155 = sbr.rel (%p153) target = $region32
      $region31: #{tpu_custom_call.1} parent=27 // pred_region
        %s156 = smul.u32 18, %s10
        %p157 = scmp.lt.s32.totalorder %s156, 35
        %s158 = scalar_select %p157, %s156, 35
        %s159 = smul.addr %s158, 3
        %s160 = smul.addr %s159, 8
        %s161 = scalar_lea.vmem %s0, %s160
        %s162 = smul.u32 18, %s10
      $region32: #{tpu_custom_call.1} parent=27 // pred_fallthru
        _
    $region28: #{tpu_custom_call.1} parent=5 // pred_fallthru
      _
    %p163 = scmp.le.s32.totalorder 1, %s10
    %p164 = scmp.lt.s32.totalorder %s10, 3
    %p165 = pnand %p163, %p164
    %p166 = pneg %p165
    // Predicated region
    $region33: #{tpu_custom_call.1} parent=5 // pred_check
      _
    $region34: #{tpu_custom_call.1} parent=5 // pred_check_branch
      %168 = sbr.rel (%p165) target = $region36
    $region35: #{tpu_custom_call.1} parent=5 // pred_region
      %s169 = ssub.s32 %s10, 1
      %s170 = smul.u32 18, %s15
      %p171 = scmp.lt.s32.totalorder %s170, 35
      %s172 = scalar_select %p171, %s170, 35
      %s173 = smul.addr %s172, 3
      %s174 = smul.addr %s173, 8
      %s175 = scalar_lea.vmem %s0, %s174
      %p176 = pneg %p36
      %p177 = pneg %p33
      %p178 = pneg %p57
      %p179 = pneg %p54
      %p180 = pneg %p78
      %p181 = pneg %p75
      %p182 = pneg %p99
      %p183 = pneg %p96
      %p184 = pneg %p125
      %p185 = pneg %p122
      %s186 = smul.u32 16, %s15
      %p187 = scmp.lt.s32.totalorder %s186, 31
      %s188 = scalar_select %p187, %s186, 31
      %s189 = smul.addr %s188, 2
      %s190 = smul.addr %s189, 8
      %s191 = scalar_lea.vmem %s4, %s190
      %s192 = smul.u32 18, %s15
      %p193 = scmp.lt.s32.totalorder %s192, 35
      %s194 = scalar_select %p193, %s192, 35
      %s195 = smul.addr %s194, 3
      %s196 = smul.addr %s195, 8
      %s197 = scalar_lea.vmem %s0, %s196
      %s198 = smul.u32 18, %s15
      %s199 = smul.u32 16, %s15
      %p200 = scmp.lt.s32.totalorder %s199, 31
      %s201 = scalar_select %p200, %s199, 31
      %s202 = smul.addr %s201, 2
      %s203 = smul.addr %s202, 8
      %s204 = scalar_lea.vmem %s4, %s203
      %s205 = smul.u32 16, %s15
      %v206 = vld [vmem:[%s197] sm:$0xff]
      %v207 = vld [vmem:[%s197 + $0x8] sm:$0xff]
      %v208 = vld [vmem:[%s197 + $0x10] sm:$0x3]
      %v209 = vld [vmem:[%s197 + $0x18] sm:$0xff]
      %v210 = vld [vmem:[%s197 + $0x20] sm:$0xff]
      %v211 = vld [vmem:[%s197 + $0x28] sm:$0x3]
      %v212 = vld [vmem:[%s197 + $0x30] sm:$0xff]
      %v213 = vld [vmem:[%s197 + $0x38] sm:$0xff]
      %v214 = vld [vmem:[%s197 + $0x40] sm:$0x3]
      %v215 = vld [vmem:[%s197 + $0x48] sm:$0xff]
      %v216 = vld [vmem:[%s197 + $0x50] sm:$0xff]
      %v217 = vld [vmem:[%s197 + $0x58] sm:$0x3]
      %v218 = vld [vmem:[%s197 + $0x60] sm:$0xff]
      %v219 = vld [vmem:[%s197 + $0x68] sm:$0xff]
      %v220 = vld [vmem:[%s197 + $0x70] sm:$0x3]
      %v221 = vld [vmem:[%s197 + $0x78] sm:$0xff]
      %v222 = vld [vmem:[%s197 + $0x80] sm:$0xff]
      %v223 = vld [vmem:[%s197 + $0x88] sm:$0x3]
      %v224 = vld [vmem:[%s197 + $0x90] sm:$0xff]
      %v225 = vld [vmem:[%s197 + $0x98] sm:$0xff]
      %v226 = vld [vmem:[%s197 + $0xa0] sm:$0x3]
      %v227 = vld [vmem:[%s197 + $0xa8] sm:$0xff]
      %v228 = vld [vmem:[%s197 + $0xb0] sm:$0xff]
      %v229 = vld [vmem:[%s197 + $0xb8] sm:$0x3]
      %v230 = vld [vmem:[%s197 + $0xc0] sm:$0xff]
      %v231 = vld [vmem:[%s197 + $0xc8] sm:$0xff]
      %v232 = vld [vmem:[%s197 + $0xd0] sm:$0x3]
      %v233 = vld [vmem:[%s197 + $0xd8] sm:$0xff]
      %v234 = vld [vmem:[%s197 + $0xe0] sm:$0xff]
      %v235 = vld [vmem:[%s197 + $0xe8] sm:$0x3]
      %v236 = vld [vmem:[%s197 + $0xf0] sm:$0xff]
      %v237 = vld [vmem:[%s197 + $0xf8] sm:$0xff]
      %v238 = vld [vmem:[%s197 + $0x100] sm:$0x3]
      %v239 = vld [vmem:[%s197 + $0x108] sm:$0xff]
      %v240 = vld [vmem:[%s197 + $0x110] sm:$0xff]
      %v241 = vld [vmem:[%s197 + $0x118] sm:$0x3]
      %v242 = vld [vmem:[%s197 + $0x120] sm:$0xff]
      %v243 = vld [vmem:[%s197 + $0x128] sm:$0xff]
      %v244 = vld [vmem:[%s197 + $0x130] sm:$0x3]
      %v245 = vld [vmem:[%s197 + $0x138] sm:$0xff]
      %v246 = vld [vmem:[%s197 + $0x140] sm:$0xff]
      %v247 = vld [vmem:[%s197 + $0x148] sm:$0x3]
      %v248 = vld [vmem:[%s197 + $0x150] sm:$0xff]
      %v249 = vld [vmem:[%s197 + $0x158] sm:$0xff]
      %v250 = vld [vmem:[%s197 + $0x160] sm:$0x3]
      %v251 = vld [vmem:[%s197 + $0x168] sm:$0xff]
      %v252 = vld [vmem:[%s197 + $0x170] sm:$0xff]
      %v253 = vld [vmem:[%s197 + $0x178] sm:$0x3]
      %v254 = vld [vmem:[%s197 + $0x180] sm:$0xff]
      %v255 = vld [vmem:[%s197 + $0x188] sm:$0xff]
      %v256 = vld [vmem:[%s197 + $0x190] sm:$0x3]
      %v257 = vld [vmem:[%s197 + $0x198] sm:$0xff]
      %v258 = vld [vmem:[%s197 + $0x1a0] sm:$0xff]
      %v259 = vld [vmem:[%s197 + $0x1a8] sm:$0x3]
      %v260 = vld [vmem:[%s1] sm:$0x1]
      %v262 = vlaneseq
      %v263 = vshrl.u32 %v262, 7
      %v264 = vsub.s32 0, %v263
      %v265 = vrot.slane %v260, %v264
      %v267 = vmul.f32 %v206, %v265
      %v268 = vmul.f32 %v207, %v265
      %v269 = vmul.f32 %v209, %v265
      %v270 = vmul.f32 %v210, %v265
      %v271 = vmul.f32 %v212, %v265
      %v272 = vmul.f32 %v213, %v265
      %v273 = vmul.f32 %v215, %v265
      %v274 = vmul.f32 %v216, %v265
      %v275 = vmul.f32 %v218, %v265
      %v276 = vmul.f32 %v219, %v265
      %v277 = vmul.f32 %v221, %v265
      %v278 = vmul.f32 %v222, %v265
      %v279 = vmul.f32 %v224, %v265
      %v280 = vmul.f32 %v225, %v265
      %v281 = vmul.f32 %v227, %v265
      %v282 = vmul.f32 %v228, %v265
      %v283 = vmul.f32 %v230, %v265
      %v284 = vmul.f32 %v231, %v265
      %v285 = vmul.f32 %v233, %v265
      %v286 = vmul.f32 %v234, %v265
      %v287 = vmul.f32 %v236, %v265
      %v288 = vmul.f32 %v237, %v265
      %v289 = vmul.f32 %v239, %v265
      %v290 = vmul.f32 %v240, %v265
      %v291 = vmul.f32 %v242, %v265
      %v292 = vmul.f32 %v243, %v265
      %v293 = vmul.f32 %v245, %v265
      %v294 = vmul.f32 %v246, %v265
      %v295 = vmul.f32 %v248, %v265
      %v296 = vmul.f32 %v249, %v265
      %v297 = vmul.f32 %v251, %v265
      %v298 = vmul.f32 %v252, %v265
      %v299 = vadd.f32 %v267, 0.0
      %v300 = vadd.f32 %v268, 0.0
      %v301 = vadd.f32 %v269, 0.0
      %v302 = vadd.f32 %v270, 0.0
      %v303 = vadd.f32 %v271, 0.0
      %v304 = vadd.f32 %v272, 0.0
      %v305 = vadd.f32 %v273, 0.0
      %v306 = vadd.f32 %v274, 0.0
      %v307 = vadd.f32 %v275, 0.0
      %v308 = vadd.f32 %v276, 0.0
      %v309 = vadd.f32 %v277, 0.0
      %v310 = vadd.f32 %v278, 0.0
      %v311 = vadd.f32 %v279, 0.0
      %v312 = vadd.f32 %v280, 0.0
      %v313 = vadd.f32 %v281, 0.0
      %v314 = vadd.f32 %v282, 0.0
      %v315 = vadd.f32 %v283, 0.0
      %v316 = vadd.f32 %v284, 0.0
      %v317 = vadd.f32 %v285, 0.0
      %v318 = vadd.f32 %v286, 0.0
      %v319 = vadd.f32 %v287, 0.0
      %v320 = vadd.f32 %v288, 0.0
      %v321 = vadd.f32 %v289, 0.0
      %v322 = vadd.f32 %v290, 0.0
      %v323 = vadd.f32 %v291, 0.0
      %v324 = vadd.f32 %v292, 0.0
      %v325 = vadd.f32 %v293, 0.0
      %v326 = vadd.f32 %v294, 0.0
      %v327 = vadd.f32 %v295, 0.0
      %v328 = vadd.f32 %v296, 0.0
      %v329 = vadd.f32 %v297, 0.0
      %v330 = vadd.f32 %v298, 0.0
      %s331 = scalar_lea.vmem %s1, 1
      %v332 = vld [vmem:[%s331] sm:$0x1]
      %v334 = vlaneseq
      %v335 = vshrl.u32 %v334, 7
      %v336 = vsub.s32 0, %v335
      %v337 = vrot.slane %v332, %v336
      %v339 = vmul.f32 %v206, %v337
      %v340 = vmul.f32 %v207, %v337
      %v341 = vmul.f32 %v208, %v337
      %v342 = vmul.f32 %v209, %v337
      %v343 = vmul.f32 %v210, %v337
      %v344 = vmul.f32 %v211, %v337
      %v345 = vmul.f32 %v212, %v337
      %v346 = vmul.f32 %v213, %v337
      %v347 = vmul.f32 %v214, %v337
      %v348 = vmul.f32 %v215, %v337
      %v349 = vmul.f32 %v216, %v337
      %v350 = vmul.f32 %v217, %v337
      %v351 = vmul.f32 %v218, %v337
      %v352 = vmul.f32 %v219, %v337
      %v353 = vmul.f32 %v220, %v337
      %v354 = vmul.f32 %v221, %v337
      %v355 = vmul.f32 %v222, %v337
      %v356 = vmul.f32 %v223, %v337
      %v357 = vmul.f32 %v224, %v337
      %v358 = vmul.f32 %v225, %v337
      %v359 = vmul.f32 %v226, %v337
      %v360 = vmul.f32 %v227, %v337
      %v361 = vmul.f32 %v228, %v337
      %v362 = vmul.f32 %v229, %v337
      %v363 = vmul.f32 %v230, %v337
      %v364 = vmul.f32 %v231, %v337
      %v365 = vmul.f32 %v232, %v337
      %v366 = vmul.f32 %v233, %v337
      %v367 = vmul.f32 %v234, %v337
      %v368 = vmul.f32 %v235, %v337
      %v369 = vmul.f32 %v236, %v337
      %v370 = vmul.f32 %v237, %v337
      %v371 = vmul.f32 %v238, %v337
      %v372 = vmul.f32 %v239, %v337
      %v373 = vmul.f32 %v240, %v337
      %v374 = vmul.f32 %v241, %v337
      %v375 = vmul.f32 %v242, %v337
      %v376 = vmul.f32 %v243, %v337
      %v377 = vmul.f32 %v244, %v337
      %v378 = vmul.f32 %v245, %v337
      %v379 = vmul.f32 %v246, %v337
      %v380 = vmul.f32 %v247, %v337
      %v381 = vmul.f32 %v248, %v337
      %v382 = vmul.f32 %v249, %v337
      %v383 = vmul.f32 %v250, %v337
      %v384 = vmul.f32 %v251, %v337
      %v385 = vmul.f32 %v252, %v337
      %v386 = vmul.f32 %v253, %v337
      %vm435 = vcmask 1046528
      %v436 = vrot.slane %v339, 1
      %v437 = vrot.slane %v340, 1
      %v438 = vsel %vm435, %v436, %v437
      %v439 = vrot.slane %v341, 1
      %v440 = vsel %vm435, %v437, %v439
      %v441 = vrot.slane %v342, 1
      %v442 = vrot.slane %v343, 1
      %v443 = vsel %vm435, %v441, %v442
      %v444 = vrot.slane %v344, 1
      %v445 = vsel %vm435, %v442, %v444
      %v446 = vrot.slane %v345, 1
      %v447 = vrot.slane %v346, 1
      %v448 = vsel %vm435, %v446, %v447
      %v449 = vrot.slane %v347, 1
      %v450 = vsel %vm435, %v447, %v449
      %v451 = vrot.slane %v348, 1
      %v452 = vrot.slane %v349, 1
      %v453 = vsel %vm435, %v451, %v452
      %v454 = vrot.slane %v350, 1
      %v455 = vsel %vm435, %v452, %v454
      %v456 = vrot.slane %v351, 1
      %v457 = vrot.slane %v352, 1
      %v458 = vsel %vm435, %v456, %v457
      %v459 = vrot.slane %v353, 1
      %v460 = vsel %vm435, %v457, %v459
      %v461 = vrot.slane %v354, 1
      %v462 = vrot.slane %v355, 1
      %v463 = vsel %vm435, %v461, %v462
      %v464 = vrot.slane %v356, 1
      %v465 = vsel %vm435, %v462, %v464
      %v466 = vrot.slane %v357, 1
      %v467 = vrot.slane %v358, 1
      %v468 = vsel %vm435, %v466, %v467
      %v469 = vrot.slane %v359, 1
      %v470 = vsel %vm435, %v467, %v469
      %v471 = vrot.slane %v360, 1
      %v472 = vrot.slane %v361, 1
      %v473 = vsel %vm435, %v471, %v472
      %v474 = vrot.slane %v362, 1
      %v475 = vsel %vm435, %v472, %v474
      %v476 = vrot.slane %v363, 1
      %v477 = vrot.slane %v364, 1
      %v478 = vsel %vm435, %v476, %v477
      %v479 = vrot.slane %v365, 1
      %v480 = vsel %vm435, %v477, %v479
      %v481 = vrot.slane %v366, 1
      %v482 = vrot.slane %v367, 1
      %v483 = vsel %vm435, %v481, %v482
      %v484 = vrot.slane %v368, 1
      %v485 = vsel %vm435, %v482, %v484
      %v486 = vrot.slane %v369, 1
      %v487 = vrot.slane %v370, 1
      %v488 = vsel %vm435, %v486, %v487
      %v489 = vrot.slane %v371, 1
      %v490 = vsel %vm435, %v487, %v489
      %v491 = vrot.slane %v372, 1
      %v492 = vrot.slane %v373, 1
      %v493 = vsel %vm435, %v491, %v492
      %v494 = vrot.slane %v374, 1
      %v495 = vsel %vm435, %v492, %v494
      %v496 = vrot.slane %v375, 1
      %v497 = vrot.slane %v376, 1
      %v498 = vsel %vm435, %v496, %v497
      %v499 = vrot.slane %v377, 1
      %v500 = vsel %vm435, %v497, %v499
      %v501 = vrot.slane %v378, 1
      %v502 = vrot.slane %v379, 1
      %v503 = vsel %vm435, %v501, %v502
      %v504 = vrot.slane %v380, 1
      %v505 = vsel %vm435, %v502, %v504
      %v506 = vrot.slane %v381, 1
      %v507 = vrot.slane %v382, 1
      %v508 = vsel %vm435, %v506, %v507
      %v509 = vrot.slane %v383, 1
      %v510 = vsel %vm435, %v507, %v509
      %v511 = vrot.slane %v384, 1
      %v512 = vrot.slane %v385, 1
      %v513 = vsel %vm435, %v511, %v512
      %v514 = vrot.slane %v386, 1
      %v515 = vsel %vm435, %v512, %v514
      %v548 = vadd.f32 %v299, %v438
      %v549 = vadd.f32 %v300, %v440
      %v550 = vadd.f32 %v301, %v443
      %v551 = vadd.f32 %v302, %v445
      %v552 = vadd.f32 %v303, %v448
      %v553 = vadd.f32 %v304, %v450
      %v554 = vadd.f32 %v305, %v453
      %v555 = vadd.f32 %v306, %v455
      %v556 = vadd.f32 %v307, %v458
      %v557 = vadd.f32 %v308, %v460
      %v558 = vadd.f32 %v309, %v463
      %v559 = vadd.f32 %v310, %v465
      %v560 = vadd.f32 %v311, %v468
      %v561 = vadd.f32 %v312, %v470
      %v562 = vadd.f32 %v313, %v473
      %v563 = vadd.f32 %v314, %v475
      %v564 = vadd.f32 %v315, %v478
      %v565 = vadd.f32 %v316, %v480
      %v566 = vadd.f32 %v317, %v483
      %v567 = vadd.f32 %v318, %v485
      %v568 = vadd.f32 %v319, %v488
      %v569 = vadd.f32 %v320, %v490
      %v570 = vadd.f32 %v321, %v493
      %v571 = vadd.f32 %v322, %v495
      %v572 = vadd.f32 %v323, %v498
      %v573 = vadd.f32 %v324, %v500
      %v574 = vadd.f32 %v325, %v503
      %v575 = vadd.f32 %v326, %v505
      %v576 = vadd.f32 %v327, %v508
      %v577 = vadd.f32 %v328, %v510
      %v578 = vadd.f32 %v329, %v513
      %v579 = vadd.f32 %v330, %v515
      %s580 = scalar_lea.vmem %s1, 2
      %v581 = vld [vmem:[%s580] sm:$0x1]
      %v583 = vlaneseq
      %v584 = vshrl.u32 %v583, 7
      %v585 = vsub.s32 0, %v584
      %v586 = vrot.slane %v581, %v585
      %v588 = vmul.f32 %v206, %v586
      %v589 = vmul.f32 %v207, %v586
      %v590 = vmul.f32 %v208, %v586
      %v591 = vmul.f32 %v209, %v586
      %v592 = vmul.f32 %v210, %v586
      %v593 = vmul.f32 %v211, %v586
      %v594 = vmul.f32 %v212, %v586
      %v595 = vmul.f32 %v213, %v586
      %v596 = vmul.f32 %v214, %v586
      %v597 = vmul.f32 %v215, %v586
      %v598 = vmul.f32 %v216, %v586
      %v599 = vmul.f32 %v217, %v586
      %v600 = vmul.f32 %v218, %v586
      %v601 = vmul.f32 %v219, %v586
      %v602 = vmul.f32 %v220, %v586
      %v603 = vmul.f32 %v221, %v586
      %v604 = vmul.f32 %v222, %v586
      %v605 = vmul.f32 %v223, %v586
      %v606 = vmul.f32 %v224, %v586
      %v607 = vmul.f32 %v225, %v586
      %v608 = vmul.f32 %v226, %v586
      %v609 = vmul.f32 %v227, %v586
      %v610 = vmul.f32 %v228, %v586
      %v611 = vmul.f32 %v229, %v586
      %v612 = vmul.f32 %v230, %v586
      %v613 = vmul.f32 %v231, %v586
      %v614 = vmul.f32 %v232, %v586
      %v615 = vmul.f32 %v233, %v586
      %v616 = vmul.f32 %v234, %v586
      %v617 = vmul.f32 %v235, %v586
      %v618 = vmul.f32 %v236, %v586
      %v619 = vmul.f32 %v237, %v586
      %v620 = vmul.f32 %v238, %v586
      %v621 = vmul.f32 %v239, %v586
      %v622 = vmul.f32 %v240, %v586
      %v623 = vmul.f32 %v241, %v586
      %v624 = vmul.f32 %v242, %v586
      %v625 = vmul.f32 %v243, %v586
      %v626 = vmul.f32 %v244, %v586
      %v627 = vmul.f32 %v245, %v586
      %v628 = vmul.f32 %v246, %v586
      %v629 = vmul.f32 %v247, %v586
      %v630 = vmul.f32 %v248, %v586
      %v631 = vmul.f32 %v249, %v586
      %v632 = vmul.f32 %v250, %v586
      %v633 = vmul.f32 %v251, %v586
      %v634 = vmul.f32 %v252, %v586
      %v635 = vmul.f32 %v253, %v586
      %vm684 = vcmask 1045504
      %v685 = vrot.slane %v588, 2
      %v686 = vrot.slane %v589, 2
      %v687 = vsel %vm684, %v685, %v686
      %v688 = vrot.slane %v590, 2
      %v689 = vsel %vm684, %v686, %v688
      %v690 = vrot.slane %v591, 2
      %v691 = vrot.slane %v592, 2
      %v692 = vsel %vm684, %v690, %v691
      %v693 = vrot.slane %v593, 2
      %v694 = vsel %vm684, %v691, %v693
      %v695 = vrot.slane %v594, 2
      %v696 = vrot.slane %v595, 2
      %v697 = vsel %vm684, %v695, %v696
      %v698 = vrot.slane %v596, 2
      %v699 = vsel %vm684, %v696, %v698
      %v700 = vrot.slane %v597, 2
      %v701 = vrot.slane %v598, 2
      %v702 = vsel %vm684, %v700, %v701
      %v703 = vrot.slane %v599, 2
      %v704 = vsel %vm684, %v701, %v703
      %v705 = vrot.slane %v600, 2
      %v706 = vrot.slane %v601, 2
      %v707 = vsel %vm684, %v705, %v706
      %v708 = vrot.slane %v602, 2
      %v709 = vsel %vm684, %v706, %v708
      %v710 = vrot.slane %v603, 2
      %v711 = vrot.slane %v604, 2
      %v712 = vsel %vm684, %v710, %v711
      %v713 = vrot.slane %v605, 2
      %v714 = vsel %vm684, %v711, %v713
      %v715 = vrot.slane %v606, 2
      %v716 = vrot.slane %v607, 2
      %v717 = vsel %vm684, %v715, %v716
      %v718 = vrot.slane %v608, 2
      %v719 = vsel %vm684, %v716, %v718
      %v720 = vrot.slane %v609, 2
      %v721 = vrot.slane %v610, 2
      %v722 = vsel %vm684, %v720, %v721
      %v723 = vrot.slane %v611, 2
      %v724 = vsel %vm684, %v721, %v723
      %v725 = vrot.slane %v612, 2
      %v726 = vrot.slane %v613, 2
      %v727 = vsel %vm684, %v725, %v726
      %v728 = vrot.slane %v614, 2
      %v729 = vsel %vm684, %v726, %v728
      %v730 = vrot.slane %v615, 2
      %v731 = vrot.slane %v616, 2
      %v732 = vsel %vm684, %v730, %v731
      %v733 = vrot.slane %v617, 2
      %v734 = vsel %vm684, %v731, %v733
      %v735 = vrot.slane %v618, 2
      %v736 = vrot.slane %v619, 2
      %v737 = vsel %vm684, %v735, %v736
      %v738 = vrot.slane %v620, 2
      %v739 = vsel %vm684, %v736, %v738
      %v740 = vrot.slane %v621, 2
      %v741 = vrot.slane %v622, 2
      %v742 = vsel %vm684, %v740, %v741
      %v743 = vrot.slane %v623, 2
      %v744 = vsel %vm684, %v741, %v743
      %v745 = vrot.slane %v624, 2
      %v746 = vrot.slane %v625, 2
      %v747 = vsel %vm684, %v745, %v746
      %v748 = vrot.slane %v626, 2
      %v749 = vsel %vm684, %v746, %v748
      %v750 = vrot.slane %v627, 2
      %v751 = vrot.slane %v628, 2
      %v752 = vsel %vm684, %v750, %v751
      %v753 = vrot.slane %v629, 2
      %v754 = vsel %vm684, %v751, %v753
      %v755 = vrot.slane %v630, 2
      %v756 = vrot.slane %v631, 2
      %v757 = vsel %vm684, %v755, %v756
      %v758 = vrot.slane %v632, 2
      %v759 = vsel %vm684, %v756, %v758
      %v760 = vrot.slane %v633, 2
      %v761 = vrot.slane %v634, 2
      %v762 = vsel %vm684, %v760, %v761
      %v763 = vrot.slane %v635, 2
      %v764 = vsel %vm684, %v761, %v763
      %v797 = vadd.f32 %v548, %v687
      %v798 = vadd.f32 %v549, %v689
      %v799 = vadd.f32 %v550, %v692
      %v800 = vadd.f32 %v551, %v694
      %v801 = vadd.f32 %v552, %v697
      %v802 = vadd.f32 %v553, %v699
      %v803 = vadd.f32 %v554, %v702
      %v804 = vadd.f32 %v555, %v704
      %v805 = vadd.f32 %v556, %v707
      %v806 = vadd.f32 %v557, %v709
      %v807 = vadd.f32 %v558, %v712
      %v808 = vadd.f32 %v559, %v714
      %v809 = vadd.f32 %v560, %v717
      %v810 = vadd.f32 %v561, %v719
      %v811 = vadd.f32 %v562, %v722
      %v812 = vadd.f32 %v563, %v724
      %v813 = vadd.f32 %v564, %v727
      %v814 = vadd.f32 %v565, %v729
      %v815 = vadd.f32 %v566, %v732
      %v816 = vadd.f32 %v567, %v734
      %v817 = vadd.f32 %v568, %v737
      %v818 = vadd.f32 %v569, %v739
      %v819 = vadd.f32 %v570, %v742
      %v820 = vadd.f32 %v571, %v744
      %v821 = vadd.f32 %v572, %v747
      %v822 = vadd.f32 %v573, %v749
      %v823 = vadd.f32 %v574, %v752
      %v824 = vadd.f32 %v575, %v754
      %v825 = vadd.f32 %v576, %v757
      %v826 = vadd.f32 %v577, %v759
      %v827 = vadd.f32 %v578, %v762
      %v828 = vadd.f32 %v579, %v764
      %s829 = scalar_lea.vmem %s1, 3
      %v830 = vld [vmem:[%s829] sm:$0x1]
      %v832 = vlaneseq
      %v833 = vshrl.u32 %v832, 7
      %v834 = vsub.s32 0, %v833
      %v835 = vrot.slane %v830, %v834
      %v837 = vmul.f32 %v209, %v835
      %v838 = vmul.f32 %v210, %v835
      %v839 = vmul.f32 %v212, %v835
      %v840 = vmul.f32 %v213, %v835
      %v841 = vmul.f32 %v215, %v835
      %v842 = vmul.f32 %v216, %v835
      %v843 = vmul.f32 %v218, %v835
      %v844 = vmul.f32 %v219, %v835
      %v845 = vmul.f32 %v221, %v835
      %v846 = vmul.f32 %v222, %v835
      %v847 = vmul.f32 %v224, %v835
      %v848 = vmul.f32 %v225, %v835
      %v849 = vmul.f32 %v227, %v835
      %v850 = vmul.f32 %v228, %v835
      %v851 = vmul.f32 %v230, %v835
      %v852 = vmul.f32 %v231, %v835
      %v853 = vmul.f32 %v233, %v835
      %v854 = vmul.f32 %v234, %v835
      %v855 = vmul.f32 %v236, %v835
      %v856 = vmul.f32 %v237, %v835
      %v857 = vmul.f32 %v239, %v835
      %v858 = vmul.f32 %v240, %v835
      %v859 = vmul.f32 %v242, %v835
      %v860 = vmul.f32 %v243, %v835
      %v861 = vmul.f32 %v245, %v835
      %v862 = vmul.f32 %v246, %v835
      %v863 = vmul.f32 %v248, %v835
      %v864 = vmul.f32 %v249, %v835
      %v865 = vmul.f32 %v251, %v835
      %v866 = vmul.f32 %v252, %v835
      %v867 = vmul.f32 %v254, %v835
      %v868 = vmul.f32 %v255, %v835
      %v869 = vadd.f32 %v797, %v837
      %v870 = vadd.f32 %v798, %v838
      %v871 = vadd.f32 %v799, %v839
      %v872 = vadd.f32 %v800, %v840
      %v873 = vadd.f32 %v801, %v841
      %v874 = vadd.f32 %v802, %v842
      %v875 = vadd.f32 %v803, %v843
      %v876 = vadd.f32 %v804, %v844
      %v877 = vadd.f32 %v805, %v845
      %v878 = vadd.f32 %v806, %v846
      %v879 = vadd.f32 %v807, %v847
      %v880 = vadd.f32 %v808, %v848
      %v881 = vadd.f32 %v809, %v849
      %v882 = vadd.f32 %v810, %v850
      %v883 = vadd.f32 %v811, %v851
      %v884 = vadd.f32 %v812, %v852
      %v885 = vadd.f32 %v813, %v853
      %v886 = vadd.f32 %v814, %v854
      %v887 = vadd.f32 %v815, %v855
      %v888 = vadd.f32 %v816, %v856
      %v889 = vadd.f32 %v817, %v857
      %v890 = vadd.f32 %v818, %v858
      %v891 = vadd.f32 %v819, %v859
      %v892 = vadd.f32 %v820, %v860
      %v893 = vadd.f32 %v821, %v861
      %v894 = vadd.f32 %v822, %v862
      %v895 = vadd.f32 %v823, %v863
      %v896 = vadd.f32 %v824, %v864
      %v897 = vadd.f32 %v825, %v865
      %v898 = vadd.f32 %v826, %v866
      %v899 = vadd.f32 %v827, %v867
      %v900 = vadd.f32 %v828, %v868
      %s901 = scalar_lea.vmem %s1, 4
      %v902 = vld [vmem:[%s901] sm:$0x1]
      %v904 = vlaneseq
      %v905 = vshrl.u32 %v904, 7
      %v906 = vsub.s32 0, %v905
      %v907 = vrot.slane %v902, %v906
      %v909 = vmul.f32 %v209, %v907
      %v910 = vmul.f32 %v210, %v907
      %v911 = vmul.f32 %v211, %v907
      %v912 = vmul.f32 %v212, %v907
      %v913 = vmul.f32 %v213, %v907
      %v914 = vmul.f32 %v214, %v907
      %v915 = vmul.f32 %v215, %v907
      %v916 = vmul.f32 %v216, %v907
      %v917 = vmul.f32 %v217, %v907
      %v918 = vmul.f32 %v218, %v907
      %v919 = vmul.f32 %v219, %v907
      %v920 = vmul.f32 %v220, %v907
      %v921 = vmul.f32 %v221, %v907
      %v922 = vmul.f32 %v222, %v907
      %v923 = vmul.f32 %v223, %v907
      %v924 = vmul.f32 %v224, %v907
      %v925 = vmul.f32 %v225, %v907
      %v926 = vmul.f32 %v226, %v907
      %v927 = vmul.f32 %v227, %v907
      %v928 = vmul.f32 %v228, %v907
      %v929 = vmul.f32 %v229, %v907
      %v930 = vmul.f32 %v230, %v907
      %v931 = vmul.f32 %v231, %v907
      %v932 = vmul.f32 %v232, %v907
      %v933 = vmul.f32 %v233, %v907
      %v934 = vmul.f32 %v234, %v907
      %v935 = vmul.f32 %v235, %v907
      %v936 = vmul.f32 %v236, %v907
      %v937 = vmul.f32 %v237, %v907
      %v938 = vmul.f32 %v238, %v907
      %v939 = vmul.f32 %v239, %v907
      %v940 = vmul.f32 %v240, %v907
      %v941 = vmul.f32 %v241, %v907
      %v942 = vmul.f32 %v242, %v907
      %v943 = vmul.f32 %v243, %v907
      %v944 = vmul.f32 %v244, %v907
      %v945 = vmul.f32 %v245, %v907
      %v946 = vmul.f32 %v246, %v907
      %v947 = vmul.f32 %v247, %v907
      %v948 = vmul.f32 %v248, %v907
      %v949 = vmul.f32 %v249, %v907
      %v950 = vmul.f32 %v250, %v907
      %v951 = vmul.f32 %v251, %v907
      %v952 = vmul.f32 %v252, %v907
      %v953 = vmul.f32 %v253, %v907
      %v954 = vmul.f32 %v254, %v907
      %v955 = vmul.f32 %v255, %v907
      %v956 = vmul.f32 %v256, %v907
      %v1005 = vrot.slane %v909, 1
      %v1006 = vrot.slane %v910, 1
      %v1007 = vsel %vm435, %v1005, %v1006
      %v1008 = vrot.slane %v911, 1
      %v1009 = vsel %vm435, %v1006, %v1008
      %v1010 = vrot.slane %v912, 1
      %v1011 = vrot.slane %v913, 1
      %v1012 = vsel %vm435, %v1010, %v1011
      %v1013 = vrot.slane %v914, 1
      %v1014 = vsel %vm435, %v1011, %v1013
      %v1015 = vrot.slane %v915, 1
      %v1016 = vrot.slane %v916, 1
      %v1017 = vsel %vm435, %v1015, %v1016
      %v1018 = vrot.slane %v917, 1
      %v1019 = vsel %vm435, %v1016, %v1018
      %v1020 = vrot.slane %v918, 1
      %v1021 = vrot.slane %v919, 1
      %v1022 = vsel %vm435, %v1020, %v1021
      %v1023 = vrot.slane %v920, 1
      %v1024 = vsel %vm435, %v1021, %v1023
      %v1025 = vrot.slane %v921, 1
      %v1026 = vrot.slane %v922, 1
      %v1027 = vsel %vm435, %v1025, %v1026
      %v1028 = vrot.slane %v923, 1
      %v1029 = vsel %vm435, %v1026, %v1028
      %v1030 = vrot.slane %v924, 1
      %v1031 = vrot.slane %v925, 1
      %v1032 = vsel %vm435, %v1030, %v1031
      %v1033 = vrot.slane %v926, 1
      %v1034 = vsel %vm435, %v1031, %v1033
      %v1035 = vrot.slane %v927, 1
      %v1036 = vrot.slane %v928, 1
      %v1037 = vsel %vm435, %v1035, %v1036
      %v1038 = vrot.slane %v929, 1
      %v1039 = vsel %vm435, %v1036, %v1038
      %v1040 = vrot.slane %v930, 1
      %v1041 = vrot.slane %v931, 1
      %v1042 = vsel %vm435, %v1040, %v1041
      %v1043 = vrot.slane %v932, 1
      %v1044 = vsel %vm435, %v1041, %v1043
      %v1045 = vrot.slane %v933, 1
      %v1046 = vrot.slane %v934, 1
      %v1047 = vsel %vm435, %v1045, %v1046
      %v1048 = vrot.slane %v935, 1
      %v1049 = vsel %vm435, %v1046, %v1048
      %v1050 = vrot.slane %v936, 1
      %v1051 = vrot.slane %v937, 1
      %v1052 = vsel %vm435, %v1050, %v1051
      %v1053 = vrot.slane %v938, 1
      %v1054 = vsel %vm435, %v1051, %v1053
      %v1055 = vrot.slane %v939, 1
      %v1056 = vrot.slane %v940, 1
      %v1057 = vsel %vm435, %v1055, %v1056
      %v1058 = vrot.slane %v941, 1
      %v1059 = vsel %vm435, %v1056, %v1058
      %v1060 = vrot.slane %v942, 1
      %v1061 = vrot.slane %v943, 1
      %v1062 = vsel %vm435, %v1060, %v1061
      %v1063 = vrot.slane %v944, 1
      %v1064 = vsel %vm435, %v1061, %v1063
      %v1065 = vrot.slane %v945, 1
      %v1066 = vrot.slane %v946, 1
      %v1067 = vsel %vm435, %v1065, %v1066
      %v1068 = vrot.slane %v947, 1
      %v1069 = vsel %vm435, %v1066, %v1068
      %v1070 = vrot.slane %v948, 1
      %v1071 = vrot.slane %v949, 1
      %v1072 = vsel %vm435, %v1070, %v1071
      %v1073 = vrot.slane %v950, 1
      %v1074 = vsel %vm435, %v1071, %v1073
      %v1075 = vrot.slane %v951, 1
      %v1076 = vrot.slane %v952, 1
      %v1077 = vsel %vm435, %v1075, %v1076
      %v1078 = vrot.slane %v953, 1
      %v1079 = vsel %vm435, %v1076, %v1078
      %v1080 = vrot.slane %v954, 1
      %v1081 = vrot.slane %v955, 1
      %v1082 = vsel %vm435, %v1080, %v1081
      %v1083 = vrot.slane %v956, 1
      %v1084 = vsel %vm435, %v1081, %v1083
      %v1117 = vadd.f32 %v869, %v1007
      %v1118 = vadd.f32 %v870, %v1009
      %v1119 = vadd.f32 %v871, %v1012
      %v1120 = vadd.f32 %v872, %v1014
      %v1121 = vadd.f32 %v873, %v1017
      %v1122 = vadd.f32 %v874, %v1019
      %v1123 = vadd.f32 %v875, %v1022
      %v1124 = vadd.f32 %v876, %v1024
      %v1125 = vadd.f32 %v877, %v1027
      %v1126 = vadd.f32 %v878, %v1029
      %v1127 = vadd.f32 %v879, %v1032
      %v1128 = vadd.f32 %v880, %v1034
      %v1129 = vadd.f32 %v881, %v1037
      %v1130 = vadd.f32 %v882, %v1039
      %v1131 = vadd.f32 %v883, %v1042
      %v1132 = vadd.f32 %v884, %v1044
      %v1133 = vadd.f32 %v885, %v1047
      %v1134 = vadd.f32 %v886, %v1049
      %v1135 = vadd.f32 %v887, %v1052
      %v1136 = vadd.f32 %v888, %v1054
      %v1137 = vadd.f32 %v889, %v1057
      %v1138 = vadd.f32 %v890, %v1059
      %v1139 = vadd.f32 %v891, %v1062
      %v1140 = vadd.f32 %v892, %v1064
      %v1141 = vadd.f32 %v893, %v1067
      %v1142 = vadd.f32 %v894, %v1069
      %v1143 = vadd.f32 %v895, %v1072
      %v1144 = vadd.f32 %v896, %v1074
      %v1145 = vadd.f32 %v897, %v1077
      %v1146 = vadd.f32 %v898, %v1079
      %v1147 = vadd.f32 %v899, %v1082
      %v1148 = vadd.f32 %v900, %v1084
      %s1149 = scalar_lea.vmem %s1, 5
      %v1150 = vld [vmem:[%s1149] sm:$0x1]
      %v1152 = vlaneseq
      %v1153 = vshrl.u32 %v1152, 7
      %v1154 = vsub.s32 0, %v1153
      %v1155 = vrot.slane %v1150, %v1154
      %v1157 = vmul.f32 %v209, %v1155
      %v1158 = vmul.f32 %v210, %v1155
      %v1159 = vmul.f32 %v211, %v1155
      %v1160 = vmul.f32 %v212, %v1155
      %v1161 = vmul.f32 %v213, %v1155
      %v1162 = vmul.f32 %v214, %v1155
      %v1163 = vmul.f32 %v215, %v1155
      %v1164 = vmul.f32 %v216, %v1155
      %v1165 = vmul.f32 %v217, %v1155
      %v1166 = vmul.f32 %v218, %v1155
      %v1167 = vmul.f32 %v219, %v1155
      %v1168 = vmul.f32 %v220, %v1155
      %v1169 = vmul.f32 %v221, %v1155
      %v1170 = vmul.f32 %v222, %v1155
      %v1171 = vmul.f32 %v223, %v1155
      %v1172 = vmul.f32 %v224, %v1155
      %v1173 = vmul.f32 %v225, %v1155
      %v1174 = vmul.f32 %v226, %v1155
      %v1175 = vmul.f32 %v227, %v1155
      %v1176 = vmul.f32 %v228, %v1155
      %v1177 = vmul.f32 %v229, %v1155
      %v1178 = vmul.f32 %v230, %v1155
      %v1179 = vmul.f32 %v231, %v1155
      %v1180 = vmul.f32 %v232, %v1155
      %v1181 = vmul.f32 %v233, %v1155
      %v1182 = vmul.f32 %v234, %v1155
      %v1183 = vmul.f32 %v235, %v1155
      %v1184 = vmul.f32 %v236, %v1155
      %v1185 = vmul.f32 %v237, %v1155
      %v1186 = vmul.f32 %v238, %v1155
      %v1187 = vmul.f32 %v239, %v1155
      %v1188 = vmul.f32 %v240, %v1155
      %v1189 = vmul.f32 %v241, %v1155
      %v1190 = vmul.f32 %v242, %v1155
      %v1191 = vmul.f32 %v243, %v1155
      %v1192 = vmul.f32 %v244, %v1155
      %v1193 = vmul.f32 %v245, %v1155
      %v1194 = vmul.f32 %v246, %v1155
      %v1195 = vmul.f32 %v247, %v1155
      %v1196 = vmul.f32 %v248, %v1155
      %v1197 = vmul.f32 %v249, %v1155
      %v1198 = vmul.f32 %v250, %v1155
      %v1199 = vmul.f32 %v251, %v1155
      %v1200 = vmul.f32 %v252, %v1155
      %v1201 = vmul.f32 %v253, %v1155
      %v1202 = vmul.f32 %v254, %v1155
      %v1203 = vmul.f32 %v255, %v1155
      %v1204 = vmul.f32 %v256, %v1155
      %v1253 = vrot.slane %v1157, 2
      %v1254 = vrot.slane %v1158, 2
      %v1255 = vsel %vm684, %v1253, %v1254
      %v1256 = vrot.slane %v1159, 2
      %v1257 = vsel %vm684, %v1254, %v1256
      %v1258 = vrot.slane %v1160, 2
      %v1259 = vrot.slane %v1161, 2
      %v1260 = vsel %vm684, %v1258, %v1259
      %v1261 = vrot.slane %v1162, 2
      %v1262 = vsel %vm684, %v1259, %v1261
      %v1263 = vrot.slane %v1163, 2
      %v1264 = vrot.slane %v1164, 2
      %v1265 = vsel %vm684, %v1263, %v1264
      %v1266 = vrot.slane %v1165, 2
      %v1267 = vsel %vm684, %v1264, %v1266
      %v1268 = vrot.slane %v1166, 2
      %v1269 = vrot.slane %v1167, 2
      %v1270 = vsel %vm684, %v1268, %v1269
      %v1271 = vrot.slane %v1168, 2
      %v1272 = vsel %vm684, %v1269, %v1271
      %v1273 = vrot.slane %v1169, 2
      %v1274 = vrot.slane %v1170, 2
      %v1275 = vsel %vm684, %v1273, %v1274
      %v1276 = vrot.slane %v1171, 2
      %v1277 = vsel %vm684, %v1274, %v1276
      %v1278 = vrot.slane %v1172, 2
      %v1279 = vrot.slane %v1173, 2
      %v1280 = vsel %vm684, %v1278, %v1279
      %v1281 = vrot.slane %v1174, 2
      %v1282 = vsel %vm684, %v1279, %v1281
      %v1283 = vrot.slane %v1175, 2
      %v1284 = vrot.slane %v1176, 2
      %v1285 = vsel %vm684, %v1283, %v1284
      %v1286 = vrot.slane %v1177, 2
      %v1287 = vsel %vm684, %v1284, %v1286
      %v1288 = vrot.slane %v1178, 2
      %v1289 = vrot.slane %v1179, 2
      %v1290 = vsel %vm684, %v1288, %v1289
      %v1291 = vrot.slane %v1180, 2
      %v1292 = vsel %vm684, %v1289, %v1291
      %v1293 = vrot.slane %v1181, 2
      %v1294 = vrot.slane %v1182, 2
      %v1295 = vsel %vm684, %v1293, %v1294
      %v1296 = vrot.slane %v1183, 2
      %v1297 = vsel %vm684, %v1294, %v1296
      %v1298 = vrot.slane %v1184, 2
      %v1299 = vrot.slane %v1185, 2
      %v1300 = vsel %vm684, %v1298, %v1299
      %v1301 = vrot.slane %v1186, 2
      %v1302 = vsel %vm684, %v1299, %v1301
      %v1303 = vrot.slane %v1187, 2
      %v1304 = vrot.slane %v1188, 2
      %v1305 = vsel %vm684, %v1303, %v1304
      %v1306 = vrot.slane %v1189, 2
      %v1307 = vsel %vm684, %v1304, %v1306
      %v1308 = vrot.slane %v1190, 2
      %v1309 = vrot.slane %v1191, 2
      %v1310 = vsel %vm684, %v1308, %v1309
      %v1311 = vrot.slane %v1192, 2
      %v1312 = vsel %vm684, %v1309, %v1311
      %v1313 = vrot.slane %v1193, 2
      %v1314 = vrot.slane %v1194, 2
      %v1315 = vsel %vm684, %v1313, %v1314
      %v1316 = vrot.slane %v1195, 2
      %v1317 = vsel %vm684, %v1314, %v1316
      %v1318 = vrot.slane %v1196, 2
      %v1319 = vrot.slane %v1197, 2
      %v1320 = vsel %vm684, %v1318, %v1319
      %v1321 = vrot.slane %v1198, 2
      %v1322 = vsel %vm684, %v1319, %v1321
      %v1323 = vrot.slane %v1199, 2
      %v1324 = vrot.slane %v1200, 2
      %v1325 = vsel %vm684, %v1323, %v1324
      %v1326 = vrot.slane %v1201, 2
      %v1327 = vsel %vm684, %v1324, %v1326
      %v1328 = vrot.slane %v1202, 2
      %v1329 = vrot.slane %v1203, 2
      %v1330 = vsel %vm684, %v1328, %v1329
      %v1331 = vrot.slane %v1204, 2
      %v1332 = vsel %vm684, %v1329, %v1331
      %v1365 = vadd.f32 %v1117, %v1255
      %v1366 = vadd.f32 %v1118, %v1257
      %v1367 = vadd.f32 %v1119, %v1260
      %v1368 = vadd.f32 %v1120, %v1262
      %v1369 = vadd.f32 %v1121, %v1265
      %v1370 = vadd.f32 %v1122, %v1267
      %v1371 = vadd.f32 %v1123, %v1270
      %v1372 = vadd.f32 %v1124, %v1272
      %v1373 = vadd.f32 %v1125, %v1275
      %v1374 = vadd.f32 %v1126, %v1277
      %v1375 = vadd.f32 %v1127, %v1280
      %v1376 = vadd.f32 %v1128, %v1282
      %v1377 = vadd.f32 %v1129, %v1285
      %v1378 = vadd.f32 %v1130, %v1287
      %v1379 = vadd.f32 %v1131, %v1290
      %v1380 = vadd.f32 %v1132, %v1292
      %v1381 = vadd.f32 %v1133, %v1295
      %v1382 = vadd.f32 %v1134, %v1297
      %v1383 = vadd.f32 %v1135, %v1300
      %v1384 = vadd.f32 %v1136, %v1302
      %v1385 = vadd.f32 %v1137, %v1305
      %v1386 = vadd.f32 %v1138, %v1307
      %v1387 = vadd.f32 %v1139, %v1310
      %v1388 = vadd.f32 %v1140, %v1312
      %v1389 = vadd.f32 %v1141, %v1315
      %v1390 = vadd.f32 %v1142, %v1317
      %v1391 = vadd.f32 %v1143, %v1320
      %v1392 = vadd.f32 %v1144, %v1322
      %v1393 = vadd.f32 %v1145, %v1325
      %v1394 = vadd.f32 %v1146, %v1327
      %v1395 = vadd.f32 %v1147, %v1330
      %v1396 = vadd.f32 %v1148, %v1332
      %s1397 = scalar_lea.vmem %s1, 6
      %v1398 = vld [vmem:[%s1397] sm:$0x1]
      %v1400 = vlaneseq
      %v1401 = vshrl.u32 %v1400, 7
      %v1402 = vsub.s32 0, %v1401
      %v1403 = vrot.slane %v1398, %v1402
      %v1405 = vmul.f32 %v212, %v1403
      %v1406 = vmul.f32 %v213, %v1403
      %v1407 = vmul.f32 %v215, %v1403
      %v1408 = vmul.f32 %v216, %v1403
      %v1409 = vmul.f32 %v218, %v1403
      %v1410 = vmul.f32 %v219, %v1403
      %v1411 = vmul.f32 %v221, %v1403
      %v1412 = vmul.f32 %v222, %v1403
      %v1413 = vmul.f32 %v224, %v1403
      %v1414 = vmul.f32 %v225, %v1403
      %v1415 = vmul.f32 %v227, %v1403
      %v1416 = vmul.f32 %v228, %v1403
      %v1417 = vmul.f32 %v230, %v1403
      %v1418 = vmul.f32 %v231, %v1403
      %v1419 = vmul.f32 %v233, %v1403
      %v1420 = vmul.f32 %v234, %v1403
      %v1421 = vmul.f32 %v236, %v1403
      %v1422 = vmul.f32 %v237, %v1403
      %v1423 = vmul.f32 %v239, %v1403
      %v1424 = vmul.f32 %v240, %v1403
      %v1425 = vmul.f32 %v242, %v1403
      %v1426 = vmul.f32 %v243, %v1403
      %v1427 = vmul.f32 %v245, %v1403
      %v1428 = vmul.f32 %v246, %v1403
      %v1429 = vmul.f32 %v248, %v1403
      %v1430 = vmul.f32 %v249, %v1403
      %v1431 = vmul.f32 %v251, %v1403
      %v1432 = vmul.f32 %v252, %v1403
      %v1433 = vmul.f32 %v254, %v1403
      %v1434 = vmul.f32 %v255, %v1403
      %v1435 = vmul.f32 %v257, %v1403
      %v1436 = vmul.f32 %v258, %v1403
      %v1437 = vadd.f32 %v1365, %v1405
      %v1438 = vadd.f32 %v1366, %v1406
      %v1439 = vadd.f32 %v1367, %v1407
      %v1440 = vadd.f32 %v1368, %v1408
      %v1441 = vadd.f32 %v1369, %v1409
      %v1442 = vadd.f32 %v1370, %v1410
      %v1443 = vadd.f32 %v1371, %v1411
      %v1444 = vadd.f32 %v1372, %v1412
      %v1445 = vadd.f32 %v1373, %v1413
      %v1446 = vadd.f32 %v1374, %v1414
      %v1447 = vadd.f32 %v1375, %v1415
      %v1448 = vadd.f32 %v1376, %v1416
      %v1449 = vadd.f32 %v1377, %v1417
      %v1450 = vadd.f32 %v1378, %v1418
      %v1451 = vadd.f32 %v1379, %v1419
      %v1452 = vadd.f32 %v1380, %v1420
      %v1453 = vadd.f32 %v1381, %v1421
      %v1454 = vadd.f32 %v1382, %v1422
      %v1455 = vadd.f32 %v1383, %v1423
      %v1456 = vadd.f32 %v1384, %v1424
      %v1457 = vadd.f32 %v1385, %v1425
      %v1458 = vadd.f32 %v1386, %v1426
      %v1459 = vadd.f32 %v1387, %v1427
      %v1460 = vadd.f32 %v1388, %v1428
      %v1461 = vadd.f32 %v1389, %v1429
      %v1462 = vadd.f32 %v1390, %v1430
      %v1463 = vadd.f32 %v1391, %v1431
      %v1464 = vadd.f32 %v1392, %v1432
      %v1465 = vadd.f32 %v1393, %v1433
      %v1466 = vadd.f32 %v1394, %v1434
      %v1467 = vadd.f32 %v1395, %v1435
      %v1468 = vadd.f32 %v1396, %v1436
      %s1469 = scalar_lea.vmem %s1, 7
      %v1470 = vld [vmem:[%s1469] sm:$0x1]
      %v1472 = vlaneseq
      %v1473 = vshrl.u32 %v1472, 7
      %v1474 = vsub.s32 0, %v1473
      %v1475 = vrot.slane %v1470, %v1474
      %v1477 = vmul.f32 %v212, %v1475
      %v1478 = vmul.f32 %v213, %v1475
      %v1479 = vmul.f32 %v214, %v1475
      %v1480 = vmul.f32 %v215, %v1475
      %v1481 = vmul.f32 %v216, %v1475
      %v1482 = vmul.f32 %v217, %v1475
      %v1483 = vmul.f32 %v218, %v1475
      %v1484 = vmul.f32 %v219, %v1475
      %v1485 = vmul.f32 %v220, %v1475
      %v1486 = vmul.f32 %v221, %v1475
      %v1487 = vmul.f32 %v222, %v1475
      %v1488 = vmul.f32 %v223, %v1475
      %v1489 = vmul.f32 %v224, %v1475
      %v1490 = vmul.f32 %v225, %v1475
      %v1491 = vmul.f32 %v226, %v1475
      %v1492 = vmul.f32 %v227, %v1475
      %v1493 = vmul.f32 %v228, %v1475
      %v1494 = vmul.f32 %v229, %v1475
      %v1495 = vmul.f32 %v230, %v1475
      %v1496 = vmul.f32 %v231, %v1475
      %v1497 = vmul.f32 %v232, %v1475
      %v1498 = vmul.f32 %v233, %v1475
      %v1499 = vmul.f32 %v234, %v1475
      %v1500 = vmul.f32 %v235, %v1475
      %v1501 = vmul.f32 %v236, %v1475
      %v1502 = vmul.f32 %v237, %v1475
      %v1503 = vmul.f32 %v238, %v1475
      %v1504 = vmul.f32 %v239, %v1475
      %v1505 = vmul.f32 %v240, %v1475
      %v1506 = vmul.f32 %v241, %v1475
      %v1507 = vmul.f32 %v242, %v1475
      %v1508 = vmul.f32 %v243, %v1475
      %v1509 = vmul.f32 %v244, %v1475
      %v1510 = vmul.f32 %v245, %v1475
      %v1511 = vmul.f32 %v246, %v1475
      %v1512 = vmul.f32 %v247, %v1475
      %v1513 = vmul.f32 %v248, %v1475
      %v1514 = vmul.f32 %v249, %v1475
      %v1515 = vmul.f32 %v250, %v1475
      %v1516 = vmul.f32 %v251, %v1475
      %v1517 = vmul.f32 %v252, %v1475
      %v1518 = vmul.f32 %v253, %v1475
      %v1519 = vmul.f32 %v254, %v1475
      %v1520 = vmul.f32 %v255, %v1475
      %v1521 = vmul.f32 %v256, %v1475
      %v1522 = vmul.f32 %v257, %v1475
      %v1523 = vmul.f32 %v258, %v1475
      %v1524 = vmul.f32 %v259, %v1475
      %v1573 = vrot.slane %v1477, 1
      %v1574 = vrot.slane %v1478, 1
      %v1575 = vsel %vm435, %v1573, %v1574
      %v1576 = vrot.slane %v1479, 1
      %v1577 = vsel %vm435, %v1574, %v1576
      %v1578 = vrot.slane %v1480, 1
      %v1579 = vrot.slane %v1481, 1
      %v1580 = vsel %vm435, %v1578, %v1579
      %v1581 = vrot.slane %v1482, 1
      %v1582 = vsel %vm435, %v1579, %v1581
      %v1583 = vrot.slane %v1483, 1
      %v1584 = vrot.slane %v1484, 1
      %v1585 = vsel %vm435, %v1583, %v1584
      %v1586 = vrot.slane %v1485, 1
      %v1587 = vsel %vm435, %v1584, %v1586
      %v1588 = vrot.slane %v1486, 1
      %v1589 = vrot.slane %v1487, 1
      %v1590 = vsel %vm435, %v1588, %v1589
      %v1591 = vrot.slane %v1488, 1
      %v1592 = vsel %vm435, %v1589, %v1591
      %v1593 = vrot.slane %v1489, 1
      %v1594 = vrot.slane %v1490, 1
      %v1595 = vsel %vm435, %v1593, %v1594
      %v1596 = vrot.slane %v1491, 1
      %v1597 = vsel %vm435, %v1594, %v1596
      %v1598 = vrot.slane %v1492, 1
      %v1599 = vrot.slane %v1493, 1
      %v1600 = vsel %vm435, %v1598, %v1599
      %v1601 = vrot.slane %v1494, 1
      %v1602 = vsel %vm435, %v1599, %v1601
      %v1603 = vrot.slane %v1495, 1
      %v1604 = vrot.slane %v1496, 1
      %v1605 = vsel %vm435, %v1603, %v1604
      %v1606 = vrot.slane %v1497, 1
      %v1607 = vsel %vm435, %v1604, %v1606
      %v1608 = vrot.slane %v1498, 1
      %v1609 = vrot.slane %v1499, 1
      %v1610 = vsel %vm435, %v1608, %v1609
      %v1611 = vrot.slane %v1500, 1
      %v1612 = vsel %vm435, %v1609, %v1611
      %v1613 = vrot.slane %v1501, 1
      %v1614 = vrot.slane %v1502, 1
      %v1615 = vsel %vm435, %v1613, %v1614
      %v1616 = vrot.slane %v1503, 1
      %v1617 = vsel %vm435, %v1614, %v1616
      %v1618 = vrot.slane %v1504, 1
      %v1619 = vrot.slane %v1505, 1
      %v1620 = vsel %vm435, %v1618, %v1619
      %v1621 = vrot.slane %v1506, 1
      %v1622 = vsel %vm435, %v1619, %v1621
      %v1623 = vrot.slane %v1507, 1
      %v1624 = vrot.slane %v1508, 1
      %v1625 = vsel %vm435, %v1623, %v1624
      %v1626 = vrot.slane %v1509, 1
      %v1627 = vsel %vm435, %v1624, %v1626
      %v1628 = vrot.slane %v1510, 1
      %v1629 = vrot.slane %v1511, 1
      %v1630 = vsel %vm435, %v1628, %v1629
      %v1631 = vrot.slane %v1512, 1
      %v1632 = vsel %vm435, %v1629, %v1631
      %v1633 = vrot.slane %v1513, 1
      %v1634 = vrot.slane %v1514, 1
      %v1635 = vsel %vm435, %v1633, %v1634
      %v1636 = vrot.slane %v1515, 1
      %v1637 = vsel %vm435, %v1634, %v1636
      %v1638 = vrot.slane %v1516, 1
      %v1639 = vrot.slane %v1517, 1
      %v1640 = vsel %vm435, %v1638, %v1639
      %v1641 = vrot.slane %v1518, 1
      %v1642 = vsel %vm435, %v1639, %v1641
      %v1643 = vrot.slane %v1519, 1
      %v1644 = vrot.slane %v1520, 1
      %v1645 = vsel %vm435, %v1643, %v1644
      %v1646 = vrot.slane %v1521, 1
      %v1647 = vsel %vm435, %v1644, %v1646
      %v1648 = vrot.slane %v1522, 1
      %v1649 = vrot.slane %v1523, 1
      %v1650 = vsel %vm435, %v1648, %v1649
      %v1651 = vrot.slane %v1524, 1
      %v1652 = vsel %vm435, %v1649, %v1651
      %v1685 = vadd.f32 %v1437, %v1575
      %v1686 = vadd.f32 %v1438, %v1577
      %v1687 = vadd.f32 %v1439, %v1580
      %v1688 = vadd.f32 %v1440, %v1582
      %v1689 = vadd.f32 %v1441, %v1585
      %v1690 = vadd.f32 %v1442, %v1587
      %v1691 = vadd.f32 %v1443, %v1590
      %v1692 = vadd.f32 %v1444, %v1592
      %v1693 = vadd.f32 %v1445, %v1595
      %v1694 = vadd.f32 %v1446, %v1597
      %v1695 = vadd.f32 %v1447, %v1600
      %v1696 = vadd.f32 %v1448, %v1602
      %v1697 = vadd.f32 %v1449, %v1605
      %v1698 = vadd.f32 %v1450, %v1607
      %v1699 = vadd.f32 %v1451, %v1610
      %v1700 = vadd.f32 %v1452, %v1612
      %v1701 = vadd.f32 %v1453, %v1615
      %v1702 = vadd.f32 %v1454, %v1617
      %v1703 = vadd.f32 %v1455, %v1620
      %v1704 = vadd.f32 %v1456, %v1622
      %v1705 = vadd.f32 %v1457, %v1625
      %v1706 = vadd.f32 %v1458, %v1627
      %v1707 = vadd.f32 %v1459, %v1630
      %v1708 = vadd.f32 %v1460, %v1632
      %v1709 = vadd.f32 %v1461, %v1635
      %v1710 = vadd.f32 %v1462, %v1637
      %v1711 = vadd.f32 %v1463, %v1640
      %v1712 = vadd.f32 %v1464, %v1642
      %v1713 = vadd.f32 %v1465, %v1645
      %v1714 = vadd.f32 %v1466, %v1647
      %v1715 = vadd.f32 %v1467, %v1650
      %v1716 = vadd.f32 %v1468, %v1652
      %s1717 = scalar_lea.vmem %s1, 8
      %v1718 = vld [vmem:[%s1717] sm:$0x1]
      %v1720 = vlaneseq
      %v1721 = vshrl.u32 %v1720, 7
      %v1722 = vsub.s32 0, %v1721
      %v1723 = vrot.slane %v1718, %v1722
      %v1725 = vmul.f32 %v212, %v1723
      %v1726 = vmul.f32 %v213, %v1723
      %v1727 = vmul.f32 %v214, %v1723
      %v1728 = vmul.f32 %v215, %v1723
      %v1729 = vmul.f32 %v216, %v1723
      %v1730 = vmul.f32 %v217, %v1723
      %v1731 = vmul.f32 %v218, %v1723
      %v1732 = vmul.f32 %v219, %v1723
      %v1733 = vmul.f32 %v220, %v1723
      %v1734 = vmul.f32 %v221, %v1723
      %v1735 = vmul.f32 %v222, %v1723
      %v1736 = vmul.f32 %v223, %v1723
      %v1737 = vmul.f32 %v224, %v1723
      %v1738 = vmul.f32 %v225, %v1723
      %v1739 = vmul.f32 %v226, %v1723
      %v1740 = vmul.f32 %v227, %v1723
      %v1741 = vmul.f32 %v228, %v1723
      %v1742 = vmul.f32 %v229, %v1723
      %v1743 = vmul.f32 %v230, %v1723
      %v1744 = vmul.f32 %v231, %v1723
      %v1745 = vmul.f32 %v232, %v1723
      %v1746 = vmul.f32 %v233, %v1723
      %v1747 = vmul.f32 %v234, %v1723
      %v1748 = vmul.f32 %v235, %v1723
      %v1749 = vmul.f32 %v236, %v1723
      %v1750 = vmul.f32 %v237, %v1723
      %v1751 = vmul.f32 %v238, %v1723
      %v1752 = vmul.f32 %v239, %v1723
      %v1753 = vmul.f32 %v240, %v1723
      %v1754 = vmul.f32 %v241, %v1723
      %v1755 = vmul.f32 %v242, %v1723
      %v1756 = vmul.f32 %v243, %v1723
      %v1757 = vmul.f32 %v244, %v1723
      %v1758 = vmul.f32 %v245, %v1723
      %v1759 = vmul.f32 %v246, %v1723
      %v1760 = vmul.f32 %v247, %v1723
      %v1761 = vmul.f32 %v248, %v1723
      %v1762 = vmul.f32 %v249, %v1723
      %v1763 = vmul.f32 %v250, %v1723
      %v1764 = vmul.f32 %v251, %v1723
      %v1765 = vmul.f32 %v252, %v1723
      %v1766 = vmul.f32 %v253, %v1723
      %v1767 = vmul.f32 %v254, %v1723
      %v1768 = vmul.f32 %v255, %v1723
      %v1769 = vmul.f32 %v256, %v1723
      %v1770 = vmul.f32 %v257, %v1723
      %v1771 = vmul.f32 %v258, %v1723
      %v1772 = vmul.f32 %v259, %v1723
      %v1821 = vrot.slane %v1725, 2
      %v1822 = vrot.slane %v1726, 2
      %v1823 = vsel %vm684, %v1821, %v1822
      %v1824 = vrot.slane %v1727, 2
      %v1825 = vsel %vm684, %v1822, %v1824
      %v1826 = vrot.slane %v1728, 2
      %v1827 = vrot.slane %v1729, 2
      %v1828 = vsel %vm684, %v1826, %v1827
      %v1829 = vrot.slane %v1730, 2
      %v1830 = vsel %vm684, %v1827, %v1829
      %v1831 = vrot.slane %v1731, 2
      %v1832 = vrot.slane %v1732, 2
      %v1833 = vsel %vm684, %v1831, %v1832
      %v1834 = vrot.slane %v1733, 2
      %v1835 = vsel %vm684, %v1832, %v1834
      %v1836 = vrot.slane %v1734, 2
      %v1837 = vrot.slane %v1735, 2
      %v1838 = vsel %vm684, %v1836, %v1837
      %v1839 = vrot.slane %v1736, 2
      %v1840 = vsel %vm684, %v1837, %v1839
      %v1841 = vrot.slane %v1737, 2
      %v1842 = vrot.slane %v1738, 2
      %v1843 = vsel %vm684, %v1841, %v1842
      %v1844 = vrot.slane %v1739, 2
      %v1845 = vsel %vm684, %v1842, %v1844
      %v1846 = vrot.slane %v1740, 2
      %v1847 = vrot.slane %v1741, 2
      %v1848 = vsel %vm684, %v1846, %v1847
      %v1849 = vrot.slane %v1742, 2
      %v1850 = vsel %vm684, %v1847, %v1849
      %v1851 = vrot.slane %v1743, 2
      %v1852 = vrot.slane %v1744, 2
      %v1853 = vsel %vm684, %v1851, %v1852
      %v1854 = vrot.slane %v1745, 2
      %v1855 = vsel %vm684, %v1852, %v1854
      %v1856 = vrot.slane %v1746, 2
      %v1857 = vrot.slane %v1747, 2
      %v1858 = vsel %vm684, %v1856, %v1857
      %v1859 = vrot.slane %v1748, 2
      %v1860 = vsel %vm684, %v1857, %v1859
      %v1861 = vrot.slane %v1749, 2
      %v1862 = vrot.slane %v1750, 2
      %v1863 = vsel %vm684, %v1861, %v1862
      %v1864 = vrot.slane %v1751, 2
      %v1865 = vsel %vm684, %v1862, %v1864
      %v1866 = vrot.slane %v1752, 2
      %v1867 = vrot.slane %v1753, 2
      %v1868 = vsel %vm684, %v1866, %v1867
      %v1869 = vrot.slane %v1754, 2
      %v1870 = vsel %vm684, %v1867, %v1869
      %v1871 = vrot.slane %v1755, 2
      %v1872 = vrot.slane %v1756, 2
      %v1873 = vsel %vm684, %v1871, %v1872
      %v1874 = vrot.slane %v1757, 2
      %v1875 = vsel %vm684, %v1872, %v1874
      %v1876 = vrot.slane %v1758, 2
      %v1877 = vrot.slane %v1759, 2
      %v1878 = vsel %vm684, %v1876, %v1877
      %v1879 = vrot.slane %v1760, 2
      %v1880 = vsel %vm684, %v1877, %v1879
      %v1881 = vrot.slane %v1761, 2
      %v1882 = vrot.slane %v1762, 2
      %v1883 = vsel %vm684, %v1881, %v1882
      %v1884 = vrot.slane %v1763, 2
      %v1885 = vsel %vm684, %v1882, %v1884
      %v1886 = vrot.slane %v1764, 2
      %v1887 = vrot.slane %v1765, 2
      %v1888 = vsel %vm684, %v1886, %v1887
      %v1889 = vrot.slane %v1766, 2
      %v1890 = vsel %vm684, %v1887, %v1889
      %v1891 = vrot.slane %v1767, 2
      %v1892 = vrot.slane %v1768, 2
      %v1893 = vsel %vm684, %v1891, %v1892
      %v1894 = vrot.slane %v1769, 2
      %v1895 = vsel %vm684, %v1892, %v1894
      %v1896 = vrot.slane %v1770, 2
      %v1897 = vrot.slane %v1771, 2
      %v1898 = vsel %vm684, %v1896, %v1897
      %v1899 = vrot.slane %v1772, 2
      %v1900 = vsel %vm684, %v1897, %v1899
      %v1933 = vadd.f32 %v1685, %v1823
      %v1934 = vadd.f32 %v1686, %v1825
      %v1935 = vadd.f32 %v1687, %v1828
      %v1936 = vadd.f32 %v1688, %v1830
      %v1937 = vadd.f32 %v1689, %v1833
      %v1938 = vadd.f32 %v1690, %v1835
      %v1939 = vadd.f32 %v1691, %v1838
      %v1940 = vadd.f32 %v1692, %v1840
      %v1941 = vadd.f32 %v1693, %v1843
      %v1942 = vadd.f32 %v1694, %v1845
      %v1943 = vadd.f32 %v1695, %v1848
      %v1944 = vadd.f32 %v1696, %v1850
      %v1945 = vadd.f32 %v1697, %v1853
      %v1946 = vadd.f32 %v1698, %v1855
      %v1947 = vadd.f32 %v1699, %v1858
      %v1948 = vadd.f32 %v1700, %v1860
      %v1949 = vadd.f32 %v1701, %v1863
      %v1950 = vadd.f32 %v1702, %v1865
      %v1951 = vadd.f32 %v1703, %v1868
      %v1952 = vadd.f32 %v1704, %v1870
      %v1953 = vadd.f32 %v1705, %v1873
      %v1954 = vadd.f32 %v1706, %v1875
      %v1955 = vadd.f32 %v1707, %v1878
      %v1956 = vadd.f32 %v1708, %v1880
      %v1957 = vadd.f32 %v1709, %v1883
      %v1958 = vadd.f32 %v1710, %v1885
      %v1959 = vadd.f32 %v1711, %v1888
      %v1960 = vadd.f32 %v1712, %v1890
      %v1961 = vadd.f32 %v1713, %v1893
      %v1962 = vadd.f32 %v1714, %v1895
      %v1963 = vadd.f32 %v1715, %v1898
      %v1964 = vadd.f32 %v1716, %v1900
      %v1965 = vld [vmem:[%s2] sm:$0xf]
      %v1966 = vld [vmem:[%s3] sm:$0x1]
      %v1968 = vlaneseq
      %v1969 = vshrl.u32 %v1968, 7
      %v1970 = vsub.s32 0, %v1969
      %v1971 = vrot.slane %v1966, %v1970
      %vm1973 = vcmask 31744
      %v1975 = vsel %vm1973, %v1933, 0
      %v1978 = vsel %vm1973, %v1934, 0
      %v1981 = vsel %vm1973, %v1935, 0
      %v1984 = vsel %vm1973, %v1936, 0
      %v1987 = vsel %vm1973, %v1937, 0
      %v1990 = vsel %vm1973, %v1938, 0
      %v1993 = vsel %vm1973, %v1939, 0
      %v1996 = vsel %vm1973, %v1940, 0
      %v1999 = vsel %vm1973, %v1941, 0
      %v2002 = vsel %vm1973, %v1942, 0
      %v2005 = vsel %vm1973, %v1943, 0
      %v2008 = vsel %vm1973, %v1944, 0
      %v2011 = vsel %vm1973, %v1945, 0
      %v2014 = vsel %vm1973, %v1946, 0
      %v2017 = vsel %vm1973, %v1947, 0
      %v2020 = vsel %vm1973, %v1948, 0
      %v2023 = vsel %vm1973, %v1949, 0
      %v2026 = vsel %vm1973, %v1950, 0
      %v2029 = vsel %vm1973, %v1951, 0
      %v2032 = vsel %vm1973, %v1952, 0
      %v2035 = vsel %vm1973, %v1953, 0
      %v2038 = vsel %vm1973, %v1954, 0
      %v2041 = vsel %vm1973, %v1955, 0
      %v2044 = vsel %vm1973, %v1956, 0
      %v2047 = vsel %vm1973, %v1957, 0
      %v2050 = vsel %vm1973, %v1958, 0
      %v2053 = vsel %vm1973, %v1959, 0
      %v2056 = vsel %vm1973, %v1960, 0
      %v2059 = vsel %vm1973, %v1961, 0
      %v2062 = vsel %vm1973, %v1962, 0
      %v2065 = vsel %vm1973, %v1963, 0
      %v2068 = vsel %vm1973, %v1964, 0
      %vm2070 = vcmask 1043456
      %v2072 = vsel %vm2070, %v1965, 0
      %2074 = vmatprep.subr.mxu0 0.0
      %2075 = vmatpush1.msra.mxu0 %v2072
      %2076 = vmatprep.subr.mxu0 0.0
      %2077 = vmatpush1.msra.mxu0 0.0
      %2078 = vmatprep.subr.mxu0 0.0
      %2079 = vmatpush1.msra.mxu0 0.0
      %2080 = vmatprep.subr.mxu0 0.0
      %2081 = vmatpush1.msra.mxu0 0.0
      %2082 = vmatprep.subr.mxu0 0.0
      %2083 = vmatpush1.msra.mxu0 0.0
      %2084 = vmatprep.subr.mxu0 0.0
      %2085 = vmatpush1.msra.mxu0 0.0
      %2086 = vmatprep.subr.mxu0 0.0
      %2087 = vmatpush1.msra.mxu0 0.0
      %2088 = vmatprep.subr.mxu0 0.0
      %2089 = vmatpush1.msra.mxu0 0.0
      %2090 = vmatprep.subr.mxu0 0.0
      %2091 = vmatpush1.msra.mxu0 0.0
      %2092 = vmatprep.subr.mxu0 0.0
      %2093 = vmatpush1.msra.mxu0 0.0
      %2094 = vmatprep.subr.mxu0 0.0
      %2095 = vmatpush1.msra.mxu0 0.0
      %2096 = vmatprep.subr.mxu0 0.0
      %2097 = vmatpush1.msra.mxu0 0.0
      %2098 = vmatprep.subr.mxu0 0.0
      %2099 = vmatpush1.msra.mxu0 0.0
      %2100 = vmatprep.subr.mxu0 0.0
      %2101 = vmatpush1.msra.mxu0 0.0
      %2102 = vmatprep.subr.mxu0 0.0
      %2103 = vmatpush1.msra.mxu0 0.0
      %2104 = vmatprep.subr.mxu0 0.0
      %2105 = vmatpush1.msra.mxu0 0.0
      %2106 = vmatprep.subr.mxu0 0.0
      %2107 = vmatpush1.msra.mxu0 0.0
      %2108 = vmatprep.subr.mxu0 0.0
      %2109 = vmatpush1.msra.mxu0 0.0
      %2110 = vmatprep.subr.mxu0 0.0
      %2111 = vmatpush1.msra.mxu0 0.0
      %2112 = vmatprep.subr.mxu0 0.0
      %2113 = vmatpush1.msra.mxu0 0.0
      %2114 = vmatprep.subr.mxu0 0.0
      %2115 = vmatpush1.msra.mxu0 0.0
      %2116 = vmatprep.subr.mxu0 0.0
      %2117 = vmatpush1.msra.mxu0 0.0
      %2118 = vmatprep.subr.mxu0 0.0
      %2119 = vmatpush1.msra.mxu0 0.0
      %2120 = vmatprep.subr.mxu0 0.0
      %2121 = vmatpush1.msra.mxu0 0.0
      %2122 = vmatprep.subr.mxu0 0.0
      %2123 = vmatpush1.msra.mxu0 0.0
      %2124 = vmatprep.subr.mxu0 0.0
      %2125 = vmatpush1.msra.mxu0 0.0
      %2126 = vmatprep.subr.mxu0 0.0
      %2127 = vmatpush1.msra.mxu0 0.0
      %2128 = vmatprep.subr.mxu0 0.0
      %2129 = vmatpush1.msra.mxu0 0.0
      %2130 = vmatprep.subr.mxu0 0.0
      %2131 = vmatpush1.msra.mxu0 0.0
      %2132 = vmatprep.subr.mxu0 0.0
      %2133 = vmatpush1.msra.mxu0 0.0
      %2134 = vmatprep.subr.mxu0 0.0
      %2135 = vmatpush1.msra.mxu0 0.0
      %2136 = vmatprep.subr.mxu0 0.0
      %2137 = vmatpush1.msra.mxu0 0.0
      %2138 = vmatprep.mubr.f32.mxu0 0.0
      %2139 = vmatmul.mubr.f32.gmra.mrb[0].mxu0 %v1975
      %v2140 = vpop.f32.mrb[0].mxu0
      %v2141 = vadd.f32 %v1971, %v2140
      %v2142 = vpop.f32.mrb[0].mxu0
      %2143 = vmatprep.mubr.f32.mxu0 0.0
      %2144 = vmatmul.mubr.f32.gmra.mrb[0].mxu0 %v1978
      %v2145 = vpop.f32.mrb[0].mxu0
      %v2146 = vadd.f32 %v1971, %v2145
      %v2147 = vpop.f32.mrb[0].mxu0
      %2148 = vmatprep.mubr.f32.mxu0 0.0
      %2149 = vmatmul.mubr.f32.gmra.mrb[0].mxu0 %v1981
      %v2150 = vpop.f32.mrb[0].mxu0
      %v2151 = vadd.f32 %v1971, %v2150
      %v2152 = vpop.f32.mrb[0].mxu0
      %2153 = vmatprep.mubr.f32.mxu0 0.0
      %2154 = vmatmul.mubr.f32.gmra.mrb[0].mxu0 %v1984
      %v2155 = vpop.f32.mrb[0].mxu0
      %v2156 = vadd.f32 %v1971, %v2155
      %v2157 = vpop.f32.mrb[0].mxu0
      %2158 = vmatprep.mubr.f32.mxu0 0.0
      %2159 = vmatmul.mubr.f32.gmra.mrb[0].mxu0 %v1987
      %v2160 = vpop.f32.mrb[0].mxu0
      %v2161 = vadd.f32 %v1971, %v2160
      %v2162 = vpop.f32.mrb[0].mxu0
      %2163 = vmatprep.mubr.f32.mxu0 0.0
      %2164 = vmatmul.mubr.f32.gmra.mrb[0].mxu0 %v1990
      %v2165 = vpop.f32.mrb[0].mxu0
      %v2166 = vadd.f32 %v1971, %v2165
      %v2167 = vpop.f32.mrb[0].mxu0
      %2168 = vmatprep.mubr.f32.mxu0 0.0
      %2169 = vmatmul.mubr.f32.gmra.mrb[0].mxu0 %v1993
      %v2170 = vpop.f32.mrb[0].mxu0
      %v2171 = vadd.f32 %v1971, %v2170
      %v2172 = vpop.f32.mrb[0].mxu0
      %2173 = vmatprep.mubr.f32.mxu0 0.0
      %2174 = vmatmul.mubr.f32.gmra.mrb[0].mxu0 %v1996
      %v2175 = vpop.f32.mrb[0].mxu0
      %v2176 = vadd.f32 %v1971, %v2175
      %v2177 = vpop.f32.mrb[0].mxu0
      %2178 = vmatprep.mubr.f32.mxu0 0.0
      %2179 = vmatmul.mubr.f32.gmra.mrb[0].mxu0 %v1999
      %v2180 = vpop.f32.mrb[0].mxu0
      %v2181 = vadd.f32 %v1971, %v2180
      %v2182 = vpop.f32.mrb[0].mxu0
      %2183 = vmatprep.mubr.f32.mxu0 0.0
      %2184 = vmatmul.mubr.f32.gmra.mrb[0].mxu0 %v2002
      %v2185 = vpop.f32.mrb[0].mxu0
      %v2186 = vadd.f32 %v1971, %v2185
      %v2187 = vpop.f32.mrb[0].mxu0
      %2188 = vmatprep.mubr.f32.mxu0 0.0
      %2189 = vmatmul.mubr.f32.gmra.mrb[0].mxu0 %v2005
      %v2190 = vpop.f32.mrb[0].mxu0
      %v2191 = vadd.f32 %v1971, %v2190
      %v2192 = vpop.f32.mrb[0].mxu0
      %2193 = vmatprep.mubr.f32.mxu0 0.0
      %2194 = vmatmul.mubr.f32.gmra.mrb[0].mxu0 %v2008
      %v2195 = vpop.f32.mrb[0].mxu0
      %v2196 = vadd.f32 %v1971, %v2195
      %v2197 = vpop.f32.mrb[0].mxu0
      %2198 = vmatprep.mubr.f32.mxu0 0.0
      %2199 = vmatmul.mubr.f32.gmra.mrb[0].mxu0 %v2011
      %v2200 = vpop.f32.mrb[0].mxu0
      %v2201 = vadd.f32 %v1971, %v2200
      %v2202 = vpop.f32.mrb[0].mxu0
      %2203 = vmatprep.mubr.f32.mxu0 0.0
      %2204 = vmatmul.mubr.f32.gmra.mrb[0].mxu0 %v2014
      %v2205 = vpop.f32.mrb[0].mxu0
      %v2206 = vadd.f32 %v1971, %v2205
      %v2207 = vpop.f32.mrb[0].mxu0
      %2208 = vmatprep.mubr.f32.mxu0 0.0
      %2209 = vmatmul.mubr.f32.gmra.mrb[0].mxu0 %v2017
      %v2210 = vpop.f32.mrb[0].mxu0
      %v2211 = vadd.f32 %v1971, %v2210
      %v2212 = vpop.f32.mrb[0].mxu0
      %2213 = vmatprep.mubr.f32.mxu0 0.0
      %2214 = vmatmul.mubr.f32.gmra.mrb[0].mxu0 %v2020
      %v2215 = vpop.f32.mrb[0].mxu0
      %v2216 = vadd.f32 %v1971, %v2215
      %v2217 = vpop.f32.mrb[0].mxu0
      %2218 = vmatprep.mubr.f32.mxu0 0.0
      %2219 = vmatmul.mubr.f32.gmra.mrb[0].mxu0 %v2023
      %v2220 = vpop.f32.mrb[0].mxu0
      %v2221 = vadd.f32 %v1971, %v2220
      %v2222 = vpop.f32.mrb[0].mxu0
      %2223 = vmatprep.mubr.f32.mxu0 0.0
      %2224 = vmatmul.mubr.f32.gmra.mrb[0].mxu0 %v2026
      %v2225 = vpop.f32.mrb[0].mxu0
      %v2226 = vadd.f32 %v1971, %v2225
      %v2227 = vpop.f32.mrb[0].mxu0
      %2228 = vmatprep.mubr.f32.mxu0 0.0
      %2229 = vmatmul.mubr.f32.gmra.mrb[0].mxu0 %v2029
      %v2230 = vpop.f32.mrb[0].mxu0
      %v2231 = vadd.f32 %v1971, %v2230
      %v2232 = vpop.f32.mrb[0].mxu0
      %2233 = vmatprep.mubr.f32.mxu0 0.0
      %2234 = vmatmul.mubr.f32.gmra.mrb[0].mxu0 %v2032
      %v2235 = vpop.f32.mrb[0].mxu0
      %v2236 = vadd.f32 %v1971, %v2235
      %v2237 = vpop.f32.mrb[0].mxu0
      %2238 = vmatprep.mubr.f32.mxu0 0.0
      %2239 = vmatmul.mubr.f32.gmra.mrb[0].mxu0 %v2035
      %v2240 = vpop.f32.mrb[0].mxu0
      %v2241 = vadd.f32 %v1971, %v2240
      %v2242 = vpop.f32.mrb[0].mxu0
      %2243 = vmatprep.mubr.f32.mxu0 0.0
      %2244 = vmatmul.mubr.f32.gmra.mrb[0].mxu0 %v2038
      %v2245 = vpop.f32.mrb[0].mxu0
      %v2246 = vadd.f32 %v1971, %v2245
      %v2247 = vpop.f32.mrb[0].mxu0
      %2248 = vmatprep.mubr.f32.mxu0 0.0
      %2249 = vmatmul.mubr.f32.gmra.mrb[0].mxu0 %v2041
      %v2250 = vpop.f32.mrb[0].mxu0
      %v2251 = vadd.f32 %v1971, %v2250
      %v2252 = vpop.f32.mrb[0].mxu0
      %2253 = vmatprep.mubr.f32.mxu0 0.0
      %2254 = vmatmul.mubr.f32.gmra.mrb[0].mxu0 %v2044
      %v2255 = vpop.f32.mrb[0].mxu0
      %v2256 = vadd.f32 %v1971, %v2255
      %v2257 = vpop.f32.mrb[0].mxu0
      %2258 = vmatprep.mubr.f32.mxu0 0.0
      %2259 = vmatmul.mubr.f32.gmra.mrb[0].mxu0 %v2047
      %v2260 = vpop.f32.mrb[0].mxu0
      %v2261 = vadd.f32 %v1971, %v2260
      %v2262 = vpop.f32.mrb[0].mxu0
      %2263 = vmatprep.mubr.f32.mxu0 0.0
      %2264 = vmatmul.mubr.f32.gmra.mrb[0].mxu0 %v2050
      %v2265 = vpop.f32.mrb[0].mxu0
      %v2266 = vadd.f32 %v1971, %v2265
      %v2267 = vpop.f32.mrb[0].mxu0
      %2268 = vmatprep.mubr.f32.mxu0 0.0
      %2269 = vmatmul.mubr.f32.gmra.mrb[0].mxu0 %v2053
      %v2270 = vpop.f32.mrb[0].mxu0
      %v2271 = vadd.f32 %v1971, %v2270
      %v2272 = vpop.f32.mrb[0].mxu0
      %2273 = vmatprep.mubr.f32.mxu0 0.0
      %2274 = vmatmul.mubr.f32.gmra.mrb[0].mxu0 %v2056
      %v2275 = vpop.f32.mrb[0].mxu0
      %v2276 = vadd.f32 %v1971, %v2275
      %v2277 = vpop.f32.mrb[0].mxu0
      %2278 = vmatprep.mubr.f32.mxu0 0.0
      %2279 = vmatmul.mubr.f32.gmra.mrb[0].mxu0 %v2059
      %v2280 = vpop.f32.mrb[0].mxu0
      %v2281 = vadd.f32 %v1971, %v2280
      %v2282 = vpop.f32.mrb[0].mxu0
      %2283 = vmatprep.mubr.f32.mxu0 0.0
      %2284 = vmatmul.mubr.f32.gmra.mrb[0].mxu0 %v2062
      %v2285 = vpop.f32.mrb[0].mxu0
      %v2286 = vadd.f32 %v1971, %v2285
      %v2287 = vpop.f32.mrb[0].mxu0
      %2288 = vmatprep.mubr.f32.mxu0 0.0
      %2289 = vmatmul.mubr.f32.gmra.mrb[0].mxu0 %v2065
      %v2290 = vpop.f32.mrb[0].mxu0
      %v2291 = vadd.f32 %v1971, %v2290
      %v2292 = vpop.f32.mrb[0].mxu0
      %2293 = vmatprep.mubr.f32.mxu0 0.0
      %2294 = vmatmul.mubr.f32.gmra.mrb[0].mxu0 %v2068
      %v2295 = vpop.f32.mrb[0].mxu0
      %v2296 = vadd.f32 %v1971, %v2295
      %v2297 = vpop.f32.mrb[0].mxu0
      %2298 = vdwg.mxu0
      %v2299 = vmax.f32 %v2141, 0.0
      %v2300 = vmax.f32 %v2146, 0.0
      %v2301 = vmax.f32 %v2151, 0.0
      %v2302 = vmax.f32 %v2156, 0.0
      %v2303 = vmax.f32 %v2161, 0.0
      %v2304 = vmax.f32 %v2166, 0.0
      %v2305 = vmax.f32 %v2171, 0.0
      %v2306 = vmax.f32 %v2176, 0.0
      %v2307 = vmax.f32 %v2181, 0.0
      %v2308 = vmax.f32 %v2186, 0.0
      %v2309 = vmax.f32 %v2191, 0.0
      %v2310 = vmax.f32 %v2196, 0.0
      %v2311 = vmax.f32 %v2201, 0.0
      %v2312 = vmax.f32 %v2206, 0.0
      %v2313 = vmax.f32 %v2211, 0.0
      %v2314 = vmax.f32 %v2216, 0.0
      %v2315 = vmax.f32 %v2221, 0.0
      %v2316 = vmax.f32 %v2226, 0.0
      %v2317 = vmax.f32 %v2231, 0.0
      %v2318 = vmax.f32 %v2236, 0.0
      %v2319 = vmax.f32 %v2241, 0.0
      %v2320 = vmax.f32 %v2246, 0.0
      %v2321 = vmax.f32 %v2251, 0.0
      %v2322 = vmax.f32 %v2256, 0.0
      %v2323 = vmax.f32 %v2261, 0.0
      %v2324 = vmax.f32 %v2266, 0.0
      %v2325 = vmax.f32 %v2271, 0.0
      %v2326 = vmax.f32 %v2276, 0.0
      %v2327 = vmax.f32 %v2281, 0.0
      %v2328 = vmax.f32 %v2286, 0.0
      %v2329 = vmax.f32 %v2291, 0.0
      %v2330 = vmax.f32 %v2296, 0.0
      %v2331 = vmin.f32 %v2299, 6.0
      %v2332 = vmin.f32 %v2300, 6.0
      %v2333 = vmin.f32 %v2301, 6.0
      %v2334 = vmin.f32 %v2302, 6.0
      %v2335 = vmin.f32 %v2303, 6.0
      %v2336 = vmin.f32 %v2304, 6.0
      %v2337 = vmin.f32 %v2305, 6.0
      %v2338 = vmin.f32 %v2306, 6.0
      %v2339 = vmin.f32 %v2307, 6.0
      %v2340 = vmin.f32 %v2308, 6.0
      %v2341 = vmin.f32 %v2309, 6.0
      %v2342 = vmin.f32 %v2310, 6.0
      %v2343 = vmin.f32 %v2311, 6.0
      %v2344 = vmin.f32 %v2312, 6.0
      %v2345 = vmin.f32 %v2313, 6.0
      %v2346 = vmin.f32 %v2314, 6.0
      %v2347 = vmin.f32 %v2315, 6.0
      %v2348 = vmin.f32 %v2316, 6.0
      %v2349 = vmin.f32 %v2317, 6.0
      %v2350 = vmin.f32 %v2318, 6.0
      %v2351 = vmin.f32 %v2319, 6.0
      %v2352 = vmin.f32 %v2320, 6.0
      %v2353 = vmin.f32 %v2321, 6.0
      %v2354 = vmin.f32 %v2322, 6.0
      %v2355 = vmin.f32 %v2323, 6.0
      %v2356 = vmin.f32 %v2324, 6.0
      %v2357 = vmin.f32 %v2325, 6.0
      %v2358 = vmin.f32 %v2326, 6.0
      %v2359 = vmin.f32 %v2327, 6.0
      %v2360 = vmin.f32 %v2328, 6.0
      %v2361 = vmin.f32 %v2329, 6.0
      %v2362 = vmin.f32 %v2330, 6.0
      %vm2363 = vcmask 64512
      %2364 = vst.msk [vmem:[%s204] sm:$0xff] %vm2363, %v2331
      %2365 = vst.msk [vmem:[%s204 + $0x8] sm:$0xff] %vm2363, %v2332
      %2366 = vst.msk [vmem:[%s204 + $0x10] sm:$0xff] %vm2363, %v2333
      %2367 = vst.msk [vmem:[%s204 + $0x18] sm:$0xff] %vm2363, %v2334
      %2368 = vst.msk [vmem:[%s204 + $0x20] sm:$0xff] %vm2363, %v2335
      %2369 = vst.msk [vmem:[%s204 + $0x28] sm:$0xff] %vm2363, %v2336
      %2370 = vst.msk [vmem:[%s204 + $0x30] sm:$0xff] %vm2363, %v2337
      %2371 = vst.msk [vmem:[%s204 + $0x38] sm:$0xff] %vm2363, %v2338
      %2372 = vst.msk [vmem:[%s204 + $0x40] sm:$0xff] %vm2363, %v2339
      %2373 = vst.msk [vmem:[%s204 + $0x48] sm:$0xff] %vm2363, %v2340
      %2374 = vst.msk [vmem:[%s204 + $0x50] sm:$0xff] %vm2363, %v2341
      %2375 = vst.msk [vmem:[%s204 + $0x58] sm:$0xff] %vm2363, %v2342
      %2376 = vst.msk [vmem:[%s204 + $0x60] sm:$0xff] %vm2363, %v2343
      %2377 = vst.msk [vmem:[%s204 + $0x68] sm:$0xff] %vm2363, %v2344
      %2378 = vst.msk [vmem:[%s204 + $0x70] sm:$0xff] %vm2363, %v2345
      %2379 = vst.msk [vmem:[%s204 + $0x78] sm:$0xff] %vm2363, %v2346
      %2380 = vst.msk [vmem:[%s204 + $0x80] sm:$0xff] %vm2363, %v2347
      %2381 = vst.msk [vmem:[%s204 + $0x88] sm:$0xff] %vm2363, %v2348
      %2382 = vst.msk [vmem:[%s204 + $0x90] sm:$0xff] %vm2363, %v2349
      %2383 = vst.msk [vmem:[%s204 + $0x98] sm:$0xff] %vm2363, %v2350
      %2384 = vst.msk [vmem:[%s204 + $0xa0] sm:$0xff] %vm2363, %v2351
      %2385 = vst.msk [vmem:[%s204 + $0xa8] sm:$0xff] %vm2363, %v2352
      %2386 = vst.msk [vmem:[%s204 + $0xb0] sm:$0xff] %vm2363, %v2353
      %2387 = vst.msk [vmem:[%s204 + $0xb8] sm:$0xff] %vm2363, %v2354
      %2388 = vst.msk [vmem:[%s204 + $0xc0] sm:$0xff] %vm2363, %v2355
      %2389 = vst.msk [vmem:[%s204 + $0xc8] sm:$0xff] %vm2363, %v2356
      %2390 = vst.msk [vmem:[%s204 + $0xd0] sm:$0xff] %vm2363, %v2357
      %2391 = vst.msk [vmem:[%s204 + $0xd8] sm:$0xff] %vm2363, %v2358
      %2392 = vst.msk [vmem:[%s204 + $0xe0] sm:$0xff] %vm2363, %v2359
      %2393 = vst.msk [vmem:[%s204 + $0xe8] sm:$0xff] %vm2363, %v2360
      %2394 = vst.msk [vmem:[%s204 + $0xf0] sm:$0xff] %vm2363, %v2361
      %2395 = vst.msk [vmem:[%s204 + $0xf8] sm:$0xff] %vm2363, %v2362
      %s2396 = smul.u32 16, %s15
      %p2397 = scmp.lt.s32.totalorder %s2396, 31
      %s2398 = scalar_select %p2397, %s2396, 31
      %s2399 = smul.addr %s2398, 2
      %s2400 = smul.addr %s2399, 8
      %s2401 = scalar_lea.vmem %s4, %s2400
      // Predicated region
      $region37: #{tpu_custom_call.1} parent=35 // pred_check
        %p2402 = pneg %p122
      $region38: #{tpu_custom_call.1} parent=35 // pred_check_branch
        %2404 = sbr.rel (%p2402) target = $region40
      $region39: #{tpu_custom_call.1} parent=35 // pred_region
        %s2405 = smul.u32 16, %s15
      $region40: #{tpu_custom_call.1} parent=35 // pred_fallthru
        _
    $region36: #{tpu_custom_call.1} parent=5 // pred_fallthru
      _
    %p2406 = scmp.le.s32.totalorder 2, %s10
    // Predicated region
    $region41: #{tpu_custom_call.1} parent=5 // pred_check
      %p2407 = pneg %p2406
    $region42: #{tpu_custom_call.1} parent=5 // pred_check_branch
      %2409 = sbr.rel (%p2407) target = $region44
    $region43: #{tpu_custom_call.1} parent=5 // pred_region
      %s2410 = ssub.s32 %s10, 2
      // Predicated region
      $region45: #{tpu_custom_call.1} parent=43 // pred_check
        %p2411 = pneg %p128
      $region46: #{tpu_custom_call.1} parent=43 // pred_check_branch
        %2413 = sbr.rel (%p2411) target = $region48
      $region47: #{tpu_custom_call.1} parent=43 // pred_region
        %s2414 = smul.u32 16, %s16
        %p2415 = scmp.lt.s32.totalorder %s2414, 31
        %s2416 = scalar_select %p2415, %s2414, 31
        %s2417 = smul.addr %s2416, 2
        %s2418 = smul.addr %s2417, 8
        %s2419 = scalar_lea.vmem %s4, %s2418
      $region48: #{tpu_custom_call.1} parent=43 // pred_fallthru
        _
    $region44: #{tpu_custom_call.1} parent=5 // pred_fallthru
      _
  $region6: #{tpu_custom_call.1} parent=0 // loop_footer
    %s14 = sadd.s32 1, %s10
  $region7: #{tpu_custom_call.1} parent=0 // loop_footer_branch
    %9 = sbr.rel target = $region3
  $region8: #{tpu_custom_call.1} parent=0 // loop_exit
    _

</llo_original>
